<compile_context>
chip_gen: v6e
topology: v6e:2x2x1
jax: 0.10.0
libtpu: 0.0.40
codegen_flags: <defaults>
</compile_context>

<pallas_src>
import jax
import jax.numpy as jnp
import numpy as np
from jax.experimental import pallas as pl
from jax.experimental.pallas import tpu as pltpu


# --------------------------------------------------------------------------
# Fused kernel: whole Encoder forward for one batch element.
# --------------------------------------------------------------------------
def _encoder_kernel(z_ref, x_ref,
                    w_self_ref, b_self_ref, wo_self_ref, bo_self_ref,
                    w_cross_ref, b_cross_ref, wo_cross_ref, bo_cross_ref,
                    pb_ref,
                    z_out_ref, x_out_ref):
    """Shapes (D = dim, Lz = z_size, Lx = x_size, Lmax = max(Lz, Lx)):

    z_ref        : (1, Lz, D)     x_ref        : (1, Lx, D)
    w_self_ref   : (D, 6D)  = [Wq|Wk|Wv of z_self  |  Wq|Wk|Wv of x_self]
    b_self_ref   : (1, 6D)
    wo_self_ref  : (D, 2D)  = [Wo of z_self | Wo of x_self]
    bo_self_ref  : (1, 2D)
    w_cross_ref  : (D, 6D)  = [Wq|Wk|Wv of cross(z<-x) | Wq|Wk|Wv of cross(x<-z)]
    b_cross_ref  : (1, 6D)
    wo_cross_ref : (D, 2D)     bo_cross_ref : (1, 2D)
    pb_ref       : (4, Lmax, Lmax) zero-padded position biases:
                   [0]=(Lz,Lz) z_self  [1]=(Lx,Lx) x_self
                   [2]=(Lz,Lx) z<-x    [3]=(Lx,Lz) x<-z
    """
    Lz, D = z_ref.shape[1], z_ref.shape[2]
    Lx = x_ref.shape[1]

    def aft(q, k, v, pb):
        # AFT-Full: sigmoid(Q) * (exp(w) @ (exp(K) * V)) / (exp(w) @ exp(K)),
        # with max-subtraction (cancels exactly in the ratio -> same result,
        # numerically stable).
        mk = jnp.max(k, axis=0, keepdims=True)                    # (1, D)
        mw = jnp.max(pb, axis=1, keepdims=True)                   # (Lq, 1)
        ek = jnp.exp(k - mk)                                      # (Lk, D)
        ew = jnp.exp(pb - mw)                                     # (Lq, Lk)
        # num and den with a single MXU call: [ek*v | ek] -> (Lk, 2D)
        kv = jnp.concatenate([ek * v, ek], axis=-1)
        agg = jnp.dot(ew, kv, preferred_element_type=jnp.float32)  # (Lq, 2D)
        num, den = agg[:, :D], agg[:, D:]
        return jax.nn.sigmoid(q) * num * pl.reciprocal(den, approx=True)

    z_in = z_ref[0].astype(jnp.float32)                           # (Lz, D)
    x_in = x_ref[0].astype(jnp.float32)                           # (Lx, D)

    # ---------------- stage 1: the two self-attention blocks ----------------
    c0 = jnp.concatenate([z_in, x_in], axis=0)                    # (Lz+Lx, D)
    p1 = jnp.dot(c0, w_self_ref[...],
                 preferred_element_type=jnp.float32) + b_self_ref[...]
    qz, kz, vz = p1[:Lz, 0:D], p1[:Lz, D:2 * D], p1[:Lz, 2 * D:3 * D]
    qx, kx, vx = p1[Lz:, 3 * D:4 * D], p1[Lz:, 4 * D:5 * D], p1[Lz:, 5 * D:6 * D]

    yz = aft(qz, kz, vz, pb_ref[0][:Lz, :Lz])
    yx = aft(qx, kx, vx, pb_ref[1][:Lx, :Lx])

    o1 = jnp.dot(jnp.concatenate([yz, yx], axis=0), wo_self_ref[...],
                 preferred_element_type=jnp.float32) + bo_self_ref[...]
    z1, x1 = o1[:Lz, 0:D], o1[Lz:, D:2 * D]

    # ---------------- stage 2: bidirectional cross attention ----------------
    c1 = jnp.concatenate([z1, x1], axis=0)                        # (Lz+Lx, D)
    p2 = jnp.dot(c1, w_cross_ref[...],
                 preferred_element_type=jnp.float32) + b_cross_ref[...]
    # z <- x : queries from z rows, keys/values from x rows
    q_zx, k_zx, v_zx = p2[:Lz, 0:D], p2[Lz:, D:2 * D], p2[Lz:, 2 * D:3 * D]
    # x <- z : queries from x rows, keys/values from z rows
    q_xz, k_xz, v_xz = p2[Lz:, 3 * D:4 * D], p2[:Lz, 4 * D:5 * D], p2[:Lz, 5 * D:6 * D]

    y_zx = aft(q_zx, k_zx, v_zx, pb_ref[2][:Lz, :Lx])
    y_xz = aft(q_xz, k_xz, v_xz, pb_ref[3][:Lx, :Lz])

    o2 = jnp.dot(jnp.concatenate([y_zx, y_xz], axis=0), wo_cross_ref[...],
                 preferred_element_type=jnp.float32) + bo_cross_ref[...]
    z_out_ref[0] = o2[:Lz, 0:D].astype(z_out_ref.dtype)
    x_out_ref[0] = o2[Lz:, D:2 * D].astype(x_out_ref.dtype)


# --------------------------------------------------------------------------
# Wrapper
# --------------------------------------------------------------------------
def encoder_forward(z, x, packed):
    """z: (B, Lz, D), x: (B, Lx, D), packed: dict from pack_encoder_params."""
    B, Lz, D = z.shape
    _, Lx, _ = x.shape
    Lmax = max(Lz, Lx)

    def fixed(shape):
        nd = len(shape)
        return pl.BlockSpec(shape, lambda b, _n=nd: (0,) * _n)

    in_specs = [
        pl.BlockSpec((1, Lz, D), lambda b: (b, 0, 0)),     # z
        pl.BlockSpec((1, Lx, D), lambda b: (b, 0, 0)),     # x
        fixed((D, 6 * D)), fixed((1, 6 * D)),              # self qkv
        fixed((D, 2 * D)), fixed((1, 2 * D)),              # self out proj
        fixed((D, 6 * D)), fixed((1, 6 * D)),              # cross qkv
        fixed((D, 2 * D)), fixed((1, 2 * D)),              # cross out proj
        fixed((4, Lmax, Lmax)),                            # position biases
    ]
    out_specs = [
        pl.BlockSpec((1, Lz, D), lambda b: (b, 0, 0)),
        pl.BlockSpec((1, Lx, D), lambda b: (b, 0, 0)),
    ]
    out_shape = (jax.ShapeDtypeStruct((B, Lz, D), z.dtype),
                 jax.ShapeDtypeStruct((B, Lx, D), x.dtype))

    return pl.pallas_call(
        _encoder_kernel,
        out_shape=out_shape,
        grid=(B,),
        in_specs=in_specs,
        out_specs=out_specs,
        compiler_params=pltpu.CompilerParams(
            dimension_semantics=("parallel",),   # batch -> both TCs on v7x
            vmem_limit_bytes=8 * 1024 * 1024,    # whole working set is tiny
        ),
    )(z, x,
      packed["w_self"], packed["b_self"], packed["wo_self"], packed["bo_self"],
      packed["w_cross"], packed["b_cross"], packed["wo_cross"], packed["bo_cross"],
      packed["pb"])


# --------------------------------------------------------------------------
# Parameters: per-module (matches the PyTorch module layout) + packing.
# --------------------------------------------------------------------------
def make_aft_params(key, dim, len_q, len_kv, dtype=jnp.float32):
    ks = jax.random.split(key, 9)
    scale = 0.02
    rn = lambda k, shape: scale * jax.random.normal(k, shape, dtype)
    return {
        "wq": rn(ks[0], (dim, dim)), "bq": rn(ks[1], (1, dim)),
        "wk": rn(ks[2], (dim, dim)), "bk": rn(ks[3], (1, dim)),
        "wv": rn(ks[4], (dim, dim)), "bv": rn(ks[5], (1, dim)),
        "wo": rn(ks[6], (dim, dim)), "bo": rn(ks[7], (1, dim)),
        "wbias": rn(ks[8], (len_q, len_kv)),
    }


def make_encoder_raw_params(key, dim, z_len, x_len):
    k1, k2, k3, k4 = jax.random.split(key, 4)
    return {
        "z_self":   make_aft_params(k1, dim, z_len, z_len),
        "x_self":   make_aft_params(k2, dim, x_len, x_len),
        "cross_zx": make_aft_params(k3, dim, z_len, x_len),  # z queries, x context
        "cross_xz": make_aft_params(k4, dim, x_len, z_len),  # x queries, z context
    }


def pack_encoder_params(raw, dim, z_len, x_len):
    """Pack 4x9 tiny tensors into 9 stacked operands (done once, outside kernel)."""
    Lmax = max(z_len, x_len)
    qkv_w = lambda p: jnp.concatenate([p["wq"], p["wk"], p["wv"]], axis=1)   # (D, 3D)
    qkv_b = lambda p: jnp.concatenate([p["bq"], p["bk"], p["bv"]], axis=1)   # (1, 3D)

    def pad_pb(pb):
        lq, lk = pb.shape
        return jnp.pad(pb, ((0, Lmax - lq), (0, Lmax - lk)))

    zs, xs, czx, cxz = raw["z_self"], raw["x_self"], raw["cross_zx"], raw["cross_xz"]
    return {
        "w_self":   jnp.concatenate([qkv_w(zs), qkv_w(xs)], axis=1),          # (D, 6D)
        "b_self":   jnp.concatenate([qkv_b(zs), qkv_b(xs)], axis=1),          # (1, 6D)
        "wo_self":  jnp.concatenate([zs["wo"], xs["wo"]], axis=1),            # (D, 2D)
        "bo_self":  jnp.concatenate([zs["bo"], xs["bo"]], axis=1),            # (1, 2D)
        "w_cross":  jnp.concatenate([qkv_w(czx), qkv_w(cxz)], axis=1),        # (D, 6D)
        "b_cross":  jnp.concatenate([qkv_b(czx), qkv_b(cxz)], axis=1),        # (1, 6D)
        "wo_cross": jnp.concatenate([czx["wo"], cxz["wo"]], axis=1),          # (D, 2D)
        "bo_cross": jnp.concatenate([czx["bo"], cxz["bo"]], axis=1),          # (1, 2D)
        "pb": jnp.stack([pad_pb(zs["wbias"]), pad_pb(xs["wbias"]),
                         pad_pb(czx["wbias"]), pad_pb(cxz["wbias"])]),        # (4,Lmax,Lmax)
    }


# --------------------------------------------------------------------------
# Pure-JAX reference (plain AFT-Full formula) for correctness checking.
# --------------------------------------------------------------------------
def _aft_ref(q_in, kv_in, p):
    q = jnp.einsum("bld,de->ble", q_in, p["wq"]) + p["bq"]
    k = jnp.einsum("bld,de->ble", kv_in, p["wk"]) + p["bk"]
    v = jnp.einsum("bld,de->ble", kv_in, p["wv"]) + p["bv"]
    ew = jnp.exp(p["wbias"])                                   # (Lq, Lk)
    ek = jnp.exp(k)                                            # (B, Lk, D)
    num = jnp.einsum("qk,bkd->bqd", ew, ek * v)
    den = jnp.einsum("qk,bkd->bqd", ew, ek)
    y = jax.nn.sigmoid(q) * num / den
    return jnp.einsum("bld,de->ble", y, p["wo"]) + p["bo"]


def encoder_reference(z, x, raw):
    z1 = _aft_ref(z, z, raw["z_self"])
    x1 = _aft_ref(x, x, raw["x_self"])
    z2 = _aft_ref(z1, x1, raw["cross_zx"])
    x2 = _aft_ref(x1, z1, raw["cross_xz"])
    return z2, x2


# --------------------------------------------------------------------------
if __name__ == "__main__":
    B = 2          # batch
    dim = 32       # feature dim
    z_len = 16     # template sequence length (z_size)
    x_len = 32     # search-region sequence length (x_size)

    key = jax.random.PRNGKey(0)
    kz, kx, kp = jax.random.split(key, 3)
    z = jax.random.normal(kz, (B, z_len, dim), jnp.float32)
    x = jax.random.normal(kx, (B, x_len, dim), jnp.float32)

    raw_params = make_encoder_raw_params(kp, dim, z_len, x_len)
    packed_params = pack_encoder_params(raw_params, dim, z_len, x_len)

    fwd = jax.jit(encoder_forward)
    z_out, x_out = fwd(z, x, packed_params)
    jax.block_until_ready((z_out, x_out))

    assert z_out.shape == (B, z_len, dim) and x_out.shape == (B, x_len, dim)
    assert jnp.all(jnp.isfinite(z_out)) and jnp.all(jnp.isfinite(x_out))

    # Check against the pure-JAX reference (loose tolerance: approx reciprocal).
    z_ref, x_ref = encoder_reference(z, x, raw_params)
    np.testing.assert_allclose(np.asarray(z_out), np.asarray(z_ref),
                               rtol=2e-2, atol=2e-3)
    np.testing.assert_allclose(np.asarray(x_out), np.asarray(x_ref),
                               rtol=2e-2, atol=2e-3)

    print("KERNEL_OK")
</pallas_src>

<mosaic_0001>
module attributes {stable_mosaic.version = 11 : i64} {
  func.func @_encoder_kernel(%arg0: i32, %arg1: memref<1x16x32xf32, #tpu.memory_space<vmem>>, %arg2: memref<1x32x32xf32, #tpu.memory_space<vmem>>, %arg3: memref<32x192xf32, #tpu.memory_space<vmem>>, %arg4: memref<1x192xf32, #tpu.memory_space<vmem>>, %arg5: memref<32x64xf32, #tpu.memory_space<vmem>>, %arg6: memref<1x64xf32, #tpu.memory_space<vmem>>, %arg7: memref<32x192xf32, #tpu.memory_space<vmem>>, %arg8: memref<1x192xf32, #tpu.memory_space<vmem>>, %arg9: memref<32x64xf32, #tpu.memory_space<vmem>>, %arg10: memref<1x64xf32, #tpu.memory_space<vmem>>, %arg11: memref<4x32x32xf32, #tpu.memory_space<vmem>>, %arg12: memref<1x16x32xf32, #tpu.memory_space<vmem>>, %arg13: memref<1x32x32xf32, #tpu.memory_space<vmem>>) attributes {dimension_semantics = [#tpu.dimension_semantics<parallel>], iteration_bounds = array<i64: 2>, scalar_prefetch = 0 : i64, scratch_operands = 0 : i64, tpu.core_type = #tpu.core_type<tc>, window_params = [{transform_indices = @transform_0, window_bounds = array<i64: 1, 16, 32>}, {transform_indices = @transform_1, window_bounds = array<i64: 1, 32, 32>}, {pipeline_mode = #tpu.pipeline_mode<synchronous>, transform_indices = @transform_2, window_bounds = array<i64: 32, 192>}, {pipeline_mode = #tpu.pipeline_mode<synchronous>, transform_indices = @transform_3, window_bounds = array<i64: 1, 192>}, {pipeline_mode = #tpu.pipeline_mode<synchronous>, transform_indices = @transform_4, window_bounds = array<i64: 32, 64>}, {pipeline_mode = #tpu.pipeline_mode<synchronous>, transform_indices = @transform_5, window_bounds = array<i64: 1, 64>}, {pipeline_mode = #tpu.pipeline_mode<synchronous>, transform_indices = @transform_6, window_bounds = array<i64: 32, 192>}, {pipeline_mode = #tpu.pipeline_mode<synchronous>, transform_indices = @transform_7, window_bounds = array<i64: 1, 192>}, {pipeline_mode = #tpu.pipeline_mode<synchronous>, transform_indices = @transform_8, window_bounds = array<i64: 32, 64>}, {pipeline_mode = #tpu.pipeline_mode<synchronous>, transform_indices = @transform_9, window_bounds = array<i64: 1, 64>}, {pipeline_mode = #tpu.pipeline_mode<synchronous>, transform_indices = @transform_10, window_bounds = array<i64: 4, 32, 32>}, {transform_indices = @transform_11, window_bounds = array<i64: 1, 16, 32>}, {transform_indices = @transform_12, window_bounds = array<i64: 1, 32, 32>}]} {
    %c0 = arith.constant 0 : index
    %c0_0 = arith.constant 0 : index
    %c0_1 = arith.constant 0 : index
    %0 = vector.load %arg1[%c0, %c0_0, %c0_1] : memref<1x16x32xf32, #tpu.memory_space<vmem>>, vector<1x16x32xf32>
    %1 = vector.shape_cast %0 : vector<1x16x32xf32> to vector<16x32xf32>
    %c0_2 = arith.constant 0 : index
    %c0_3 = arith.constant 0 : index
    %c0_4 = arith.constant 0 : index
    %2 = vector.load %arg2[%c0_2, %c0_3, %c0_4] : memref<1x32x32xf32, #tpu.memory_space<vmem>>, vector<1x32x32xf32>
    %3 = vector.shape_cast %2 : vector<1x32x32xf32> to vector<32x32xf32>
    %4 = tpu.concatenate %1, %3 in 0 : vector<16x32xf32>, vector<32x32xf32> -> vector<48x32xf32>
    %c0_5 = arith.constant 0 : index
    %c0_6 = arith.constant 0 : index
    %5 = vector.load %arg3[%c0_5, %c0_6] : memref<32x192xf32, #tpu.memory_space<vmem>>, vector<32x192xf32>
    %cst = arith.constant dense<0.000000e+00> : vector<48x192xf32>
    %6 = tpu.matmul %4, %5, %cst {dimension_numbers = #tpu.dot_dimension_numbers<[1], [0], [0], [1], [0, 0, 1, 1], [], []>} : vector<48x32xf32>, vector<32x192xf32>, vector<48x192xf32> -> vector<48x192xf32>
    %c0_7 = arith.constant 0 : index
    %c0_8 = arith.constant 0 : index
    %7 = vector.load %arg4[%c0_7, %c0_8] : memref<1x192xf32, #tpu.memory_space<vmem>>, vector<1x192xf32>
    %8 = vector.broadcast %7 : vector<1x192xf32> to vector<48x192xf32>
    %9 = arith.addf %6, %8 : vector<48x192xf32>
    %10 = vector.extract_strided_slice %9 {offsets = [0, 0], sizes = [16, 32], strides = [1, 1]} : vector<48x192xf32> to vector<16x32xf32>
    %11 = vector.extract_strided_slice %9 {offsets = [0, 32], sizes = [16, 32], strides = [1, 1]} : vector<48x192xf32> to vector<16x32xf32>
    %12 = vector.extract_strided_slice %9 {offsets = [0, 64], sizes = [16, 32], strides = [1, 1]} : vector<48x192xf32> to vector<16x32xf32>
    %13 = vector.extract_strided_slice %9 {offsets = [16, 96], sizes = [32, 32], strides = [1, 1]} : vector<48x192xf32> to vector<32x32xf32>
    %14 = vector.extract_strided_slice %9 {offsets = [16, 128], sizes = [32, 32], strides = [1, 1]} : vector<48x192xf32> to vector<32x32xf32>
    %15 = vector.extract_strided_slice %9 {offsets = [16, 160], sizes = [32, 32], strides = [1, 1]} : vector<48x192xf32> to vector<32x32xf32>
    %c0_9 = arith.constant 0 : index
    %c0_10 = arith.constant 0 : index
    %c0_11 = arith.constant 0 : index
    %16 = vector.load %arg11[%c0_9, %c0_10, %c0_11] : memref<4x32x32xf32, #tpu.memory_space<vmem>>, vector<1x32x32xf32>
    %17 = vector.shape_cast %16 : vector<1x32x32xf32> to vector<32x32xf32>
    %18 = vector.extract_strided_slice %17 {offsets = [0, 0], sizes = [16, 16], strides = [1, 1]} : vector<32x32xf32> to vector<16x16xf32>
    %cst_12 = arith.constant dense<0xFF800000> : vector<32xf32>
    %19 = vector.multi_reduction <maximumf>, %11, %cst_12 [0] : vector<16x32xf32> to vector<32xf32>
    %20 = vector.shape_cast %19 : vector<32xf32> to vector<1x32xf32>
    %cst_13 = arith.constant dense<0xFF800000> : vector<16xf32>
    %21 = vector.multi_reduction <maximumf>, %18, %cst_13 [1] : vector<16x16xf32> to vector<16xf32>
    %22 = vector.shape_cast %21 : vector<16xf32> to vector<16x1xf32>
    %23 = vector.broadcast %20 : vector<1x32xf32> to vector<16x32xf32>
    %24 = arith.subf %11, %23 : vector<16x32xf32>
    %25 = math.exp %24 : vector<16x32xf32>
    %26 = vector.broadcast %22 : vector<16x1xf32> to vector<16x16xf32>
    %27 = arith.subf %18, %26 : vector<16x16xf32>
    %28 = math.exp %27 : vector<16x16xf32>
    %29 = arith.mulf %25, %12 : vector<16x32xf32>
    %30 = tpu.concatenate %29, %25 in 1 : vector<16x32xf32>, vector<16x32xf32> -> vector<16x64xf32>
    %cst_14 = arith.constant dense<0.000000e+00> : vector<16x64xf32>
    %31 = tpu.matmul %28, %30, %cst_14 {dimension_numbers = #tpu.dot_dimension_numbers<[1], [0], [0], [1], [0, 0, 1, 1], [], []>} : vector<16x16xf32>, vector<16x64xf32>, vector<16x64xf32> -> vector<16x64xf32>
    %32 = vector.extract_strided_slice %31 {offsets = [0, 0], sizes = [16, 32], strides = [1, 1]} : vector<16x64xf32> to vector<16x32xf32>
    %33 = vector.extract_strided_slice %31 {offsets = [0, 32], sizes = [16, 32], strides = [1, 1]} : vector<16x64xf32> to vector<16x32xf32>
    %34 = arith.negf %10 : vector<16x32xf32>
    %35 = math.exp %34 : vector<16x32xf32>
    %cst_15 = arith.constant 1.000000e+00 : f32
    %36 = vector.broadcast %cst_15 : f32 to vector<16x32xf32>
    %37 = arith.addf %36, %35 : vector<16x32xf32>
    %38 = arith.divf %36, %37 : vector<16x32xf32>
    %39 = arith.mulf %38, %32 : vector<16x32xf32>
    %40 = tpu.reciprocal %33 {approx = true} : vector<16x32xf32> -> vector<16x32xf32>
    %41 = arith.mulf %39, %40 : vector<16x32xf32>
    %c1 = arith.constant 1 : index
    %c0_16 = arith.constant 0 : index
    %c0_17 = arith.constant 0 : index
    %42 = vector.load %arg11[%c1, %c0_16, %c0_17] : memref<4x32x32xf32, #tpu.memory_space<vmem>>, vector<1x32x32xf32>
    %43 = vector.shape_cast %42 : vector<1x32x32xf32> to vector<32x32xf32>
    %cst_18 = arith.constant dense<0xFF800000> : vector<32xf32>
    %44 = vector.multi_reduction <maximumf>, %14, %cst_18 [0] : vector<32x32xf32> to vector<32xf32>
    %45 = vector.shape_cast %44 : vector<32xf32> to vector<1x32xf32>
    %cst_19 = arith.constant dense<0xFF800000> : vector<32xf32>
    %46 = vector.multi_reduction <maximumf>, %43, %cst_19 [1] : vector<32x32xf32> to vector<32xf32>
    %47 = vector.shape_cast %46 : vector<32xf32> to vector<32x1xf32>
    %48 = vector.broadcast %45 : vector<1x32xf32> to vector<32x32xf32>
    %49 = arith.subf %14, %48 : vector<32x32xf32>
    %50 = math.exp %49 : vector<32x32xf32>
    %51 = vector.broadcast %47 : vector<32x1xf32> to vector<32x32xf32>
    %52 = arith.subf %43, %51 : vector<32x32xf32>
    %53 = math.exp %52 : vector<32x32xf32>
    %54 = arith.mulf %50, %15 : vector<32x32xf32>
    %55 = tpu.concatenate %54, %50 in 1 : vector<32x32xf32>, vector<32x32xf32> -> vector<32x64xf32>
    %cst_20 = arith.constant dense<0.000000e+00> : vector<32x64xf32>
    %56 = tpu.matmul %53, %55, %cst_20 {dimension_numbers = #tpu.dot_dimension_numbers<[1], [0], [0], [1], [0, 0, 1, 1], [], []>} : vector<32x32xf32>, vector<32x64xf32>, vector<32x64xf32> -> vector<32x64xf32>
    %57 = vector.extract_strided_slice %56 {offsets = [0, 0], sizes = [32, 32], strides = [1, 1]} : vector<32x64xf32> to vector<32x32xf32>
    %58 = vector.extract_strided_slice %56 {offsets = [0, 32], sizes = [32, 32], strides = [1, 1]} : vector<32x64xf32> to vector<32x32xf32>
    %59 = arith.negf %13 : vector<32x32xf32>
    %60 = math.exp %59 : vector<32x32xf32>
    %cst_21 = arith.constant 1.000000e+00 : f32
    %61 = vector.broadcast %cst_21 : f32 to vector<32x32xf32>
    %62 = arith.addf %61, %60 : vector<32x32xf32>
    %63 = arith.divf %61, %62 : vector<32x32xf32>
    %64 = arith.mulf %63, %57 : vector<32x32xf32>
    %65 = tpu.reciprocal %58 {approx = true} : vector<32x32xf32> -> vector<32x32xf32>
    %66 = arith.mulf %64, %65 : vector<32x32xf32>
    %67 = tpu.concatenate %41, %66 in 0 : vector<16x32xf32>, vector<32x32xf32> -> vector<48x32xf32>
    %c0_22 = arith.constant 0 : index
    %c0_23 = arith.constant 0 : index
    %68 = vector.load %arg5[%c0_22, %c0_23] : memref<32x64xf32, #tpu.memory_space<vmem>>, vector<32x64xf32>
    %cst_24 = arith.constant dense<0.000000e+00> : vector<48x64xf32>
    %69 = tpu.matmul %67, %68, %cst_24 {dimension_numbers = #tpu.dot_dimension_numbers<[1], [0], [0], [1], [0, 0, 1, 1], [], []>} : vector<48x32xf32>, vector<32x64xf32>, vector<48x64xf32> -> vector<48x64xf32>
    %c0_25 = arith.constant 0 : index
    %c0_26 = arith.constant 0 : index
    %70 = vector.load %arg6[%c0_25, %c0_26] : memref<1x64xf32, #tpu.memory_space<vmem>>, vector<1x64xf32>
    %71 = vector.broadcast %70 : vector<1x64xf32> to vector<48x64xf32>
    %72 = arith.addf %69, %71 : vector<48x64xf32>
    %73 = vector.extract_strided_slice %72 {offsets = [0, 0], sizes = [16, 32], strides = [1, 1]} : vector<48x64xf32> to vector<16x32xf32>
    %74 = vector.extract_strided_slice %72 {offsets = [16, 32], sizes = [32, 32], strides = [1, 1]} : vector<48x64xf32> to vector<32x32xf32>
    %75 = tpu.concatenate %73, %74 in 0 : vector<16x32xf32>, vector<32x32xf32> -> vector<48x32xf32>
    %c0_27 = arith.constant 0 : index
    %c0_28 = arith.constant 0 : index
    %76 = vector.load %arg7[%c0_27, %c0_28] : memref<32x192xf32, #tpu.memory_space<vmem>>, vector<32x192xf32>
    %cst_29 = arith.constant dense<0.000000e+00> : vector<48x192xf32>
    %77 = tpu.matmul %75, %76, %cst_29 {dimension_numbers = #tpu.dot_dimension_numbers<[1], [0], [0], [1], [0, 0, 1, 1], [], []>} : vector<48x32xf32>, vector<32x192xf32>, vector<48x192xf32> -> vector<48x192xf32>
    %c0_30 = arith.constant 0 : index
    %c0_31 = arith.constant 0 : index
    %78 = vector.load %arg8[%c0_30, %c0_31] : memref<1x192xf32, #tpu.memory_space<vmem>>, vector<1x192xf32>
    %79 = vector.broadcast %78 : vector<1x192xf32> to vector<48x192xf32>
    %80 = arith.addf %77, %79 : vector<48x192xf32>
    %81 = vector.extract_strided_slice %80 {offsets = [0, 0], sizes = [16, 32], strides = [1, 1]} : vector<48x192xf32> to vector<16x32xf32>
    %82 = vector.extract_strided_slice %80 {offsets = [16, 32], sizes = [32, 32], strides = [1, 1]} : vector<48x192xf32> to vector<32x32xf32>
    %83 = vector.extract_strided_slice %80 {offsets = [16, 64], sizes = [32, 32], strides = [1, 1]} : vector<48x192xf32> to vector<32x32xf32>
    %84 = vector.extract_strided_slice %80 {offsets = [16, 96], sizes = [32, 32], strides = [1, 1]} : vector<48x192xf32> to vector<32x32xf32>
    %85 = vector.extract_strided_slice %80 {offsets = [0, 128], sizes = [16, 32], strides = [1, 1]} : vector<48x192xf32> to vector<16x32xf32>
    %86 = vector.extract_strided_slice %80 {offsets = [0, 160], sizes = [16, 32], strides = [1, 1]} : vector<48x192xf32> to vector<16x32xf32>
    %c2 = arith.constant 2 : index
    %c0_32 = arith.constant 0 : index
    %c0_33 = arith.constant 0 : index
    %87 = vector.load %arg11[%c2, %c0_32, %c0_33] : memref<4x32x32xf32, #tpu.memory_space<vmem>>, vector<1x32x32xf32>
    %88 = vector.shape_cast %87 : vector<1x32x32xf32> to vector<32x32xf32>
    %89 = vector.extract_strided_slice %88 {offsets = [0, 0], sizes = [16, 32], strides = [1, 1]} : vector<32x32xf32> to vector<16x32xf32>
    %cst_34 = arith.constant dense<0xFF800000> : vector<32xf32>
    %90 = vector.multi_reduction <maximumf>, %82, %cst_34 [0] : vector<32x32xf32> to vector<32xf32>
    %91 = vector.shape_cast %90 : vector<32xf32> to vector<1x32xf32>
    %cst_35 = arith.constant dense<0xFF800000> : vector<16xf32>
    %92 = vector.multi_reduction <maximumf>, %89, %cst_35 [1] : vector<16x32xf32> to vector<16xf32>
    %93 = vector.shape_cast %92 : vector<16xf32> to vector<16x1xf32>
    %94 = vector.broadcast %91 : vector<1x32xf32> to vector<32x32xf32>
    %95 = arith.subf %82, %94 : vector<32x32xf32>
    %96 = math.exp %95 : vector<32x32xf32>
    %97 = vector.broadcast %93 : vector<16x1xf32> to vector<16x32xf32>
    %98 = arith.subf %89, %97 : vector<16x32xf32>
    %99 = math.exp %98 : vector<16x32xf32>
    %100 = arith.mulf %96, %83 : vector<32x32xf32>
    %101 = tpu.concatenate %100, %96 in 1 : vector<32x32xf32>, vector<32x32xf32> -> vector<32x64xf32>
    %cst_36 = arith.constant dense<0.000000e+00> : vector<16x64xf32>
    %102 = tpu.matmul %99, %101, %cst_36 {dimension_numbers = #tpu.dot_dimension_numbers<[1], [0], [0], [1], [0, 0, 1, 1], [], []>} : vector<16x32xf32>, vector<32x64xf32>, vector<16x64xf32> -> vector<16x64xf32>
    %103 = vector.extract_strided_slice %102 {offsets = [0, 0], sizes = [16, 32], strides = [1, 1]} : vector<16x64xf32> to vector<16x32xf32>
    %104 = vector.extract_strided_slice %102 {offsets = [0, 32], sizes = [16, 32], strides = [1, 1]} : vector<16x64xf32> to vector<16x32xf32>
    %105 = arith.negf %81 : vector<16x32xf32>
    %106 = math.exp %105 : vector<16x32xf32>
    %cst_37 = arith.constant 1.000000e+00 : f32
    %107 = vector.broadcast %cst_37 : f32 to vector<16x32xf32>
    %108 = arith.addf %107, %106 : vector<16x32xf32>
    %109 = arith.divf %107, %108 : vector<16x32xf32>
    %110 = arith.mulf %109, %103 : vector<16x32xf32>
    %111 = tpu.reciprocal %104 {approx = true} : vector<16x32xf32> -> vector<16x32xf32>
    %112 = arith.mulf %110, %111 : vector<16x32xf32>
    %c3 = arith.constant 3 : index
    %c0_38 = arith.constant 0 : index
    %c0_39 = arith.constant 0 : index
    %113 = vector.load %arg11[%c3, %c0_38, %c0_39] : memref<4x32x32xf32, #tpu.memory_space<vmem>>, vector<1x32x32xf32>
    %114 = vector.shape_cast %113 : vector<1x32x32xf32> to vector<32x32xf32>
    %115 = vector.extract_strided_slice %114 {offsets = [0, 0], sizes = [32, 16], strides = [1, 1]} : vector<32x32xf32> to vector<32x16xf32>
    %cst_40 = arith.constant dense<0xFF800000> : vector<32xf32>
    %116 = vector.multi_reduction <maximumf>, %85, %cst_40 [0] : vector<16x32xf32> to vector<32xf32>
    %117 = vector.shape_cast %116 : vector<32xf32> to vector<1x32xf32>
    %cst_41 = arith.constant dense<0xFF800000> : vector<32xf32>
    %118 = vector.multi_reduction <maximumf>, %115, %cst_41 [1] : vector<32x16xf32> to vector<32xf32>
    %119 = vector.shape_cast %118 : vector<32xf32> to vector<32x1xf32>
    %120 = vector.broadcast %117 : vector<1x32xf32> to vector<16x32xf32>
    %121 = arith.subf %85, %120 : vector<16x32xf32>
    %122 = math.exp %121 : vector<16x32xf32>
    %123 = vector.broadcast %119 : vector<32x1xf32> to vector<32x16xf32>
    %124 = arith.subf %115, %123 : vector<32x16xf32>
    %125 = math.exp %124 : vector<32x16xf32>
    %126 = arith.mulf %122, %86 : vector<16x32xf32>
    %127 = tpu.concatenate %126, %122 in 1 : vector<16x32xf32>, vector<16x32xf32> -> vector<16x64xf32>
    %cst_42 = arith.constant dense<0.000000e+00> : vector<32x64xf32>
    %128 = tpu.matmul %125, %127, %cst_42 {dimension_numbers = #tpu.dot_dimension_numbers<[1], [0], [0], [1], [0, 0, 1, 1], [], []>} : vector<32x16xf32>, vector<16x64xf32>, vector<32x64xf32> -> vector<32x64xf32>
    %129 = vector.extract_strided_slice %128 {offsets = [0, 0], sizes = [32, 32], strides = [1, 1]} : vector<32x64xf32> to vector<32x32xf32>
    %130 = vector.extract_strided_slice %128 {offsets = [0, 32], sizes = [32, 32], strides = [1, 1]} : vector<32x64xf32> to vector<32x32xf32>
    %131 = arith.negf %84 : vector<32x32xf32>
    %132 = math.exp %131 : vector<32x32xf32>
    %cst_43 = arith.constant 1.000000e+00 : f32
    %133 = vector.broadcast %cst_43 : f32 to vector<32x32xf32>
    %134 = arith.addf %133, %132 : vector<32x32xf32>
    %135 = arith.divf %133, %134 : vector<32x32xf32>
    %136 = arith.mulf %135, %129 : vector<32x32xf32>
    %137 = tpu.reciprocal %130 {approx = true} : vector<32x32xf32> -> vector<32x32xf32>
    %138 = arith.mulf %136, %137 : vector<32x32xf32>
    %139 = tpu.concatenate %112, %138 in 0 : vector<16x32xf32>, vector<32x32xf32> -> vector<48x32xf32>
    %c0_44 = arith.constant 0 : index
    %c0_45 = arith.constant 0 : index
    %140 = vector.load %arg9[%c0_44, %c0_45] : memref<32x64xf32, #tpu.memory_space<vmem>>, vector<32x64xf32>
    %cst_46 = arith.constant dense<0.000000e+00> : vector<48x64xf32>
    %141 = tpu.matmul %139, %140, %cst_46 {dimension_numbers = #tpu.dot_dimension_numbers<[1], [0], [0], [1], [0, 0, 1, 1], [], []>} : vector<48x32xf32>, vector<32x64xf32>, vector<48x64xf32> -> vector<48x64xf32>
    %c0_47 = arith.constant 0 : index
    %c0_48 = arith.constant 0 : index
    %142 = vector.load %arg10[%c0_47, %c0_48] : memref<1x64xf32, #tpu.memory_space<vmem>>, vector<1x64xf32>
    %143 = vector.broadcast %142 : vector<1x64xf32> to vector<48x64xf32>
    %144 = arith.addf %141, %143 : vector<48x64xf32>
    %145 = vector.extract_strided_slice %144 {offsets = [0, 0], sizes = [16, 32], strides = [1, 1]} : vector<48x64xf32> to vector<16x32xf32>
    %c0_49 = arith.constant 0 : index
    %c0_50 = arith.constant 0 : index
    %c0_51 = arith.constant 0 : index
    %146 = vector.load %arg12[%c0_49, %c0_50, %c0_51] : memref<1x16x32xf32, #tpu.memory_space<vmem>>, vector<1x16x32xf32>
    %147 = vector.shape_cast %146 : vector<1x16x32xf32> to vector<16x32xf32>
    %148 = vector.shape_cast %145 : vector<16x32xf32> to vector<1x16x32xf32>
    tpu.vector_store %arg12[%c0_49, %c0_50, %c0_51], %148 {strides = array<i32>} : memref<1x16x32xf32, #tpu.memory_space<vmem>>, vector<1x16x32xf32>,
    %149 = vector.extract_strided_slice %144 {offsets = [16, 32], sizes = [32, 32], strides = [1, 1]} : vector<48x64xf32> to vector<32x32xf32>
    %c0_52 = arith.constant 0 : index
    %c0_53 = arith.constant 0 : index
    %c0_54 = arith.constant 0 : index
    %150 = vector.load %arg13[%c0_52, %c0_53, %c0_54] : memref<1x32x32xf32, #tpu.memory_space<vmem>>, vector<1x32x32xf32>
    %151 = vector.shape_cast %150 : vector<1x32x32xf32> to vector<32x32xf32>
    %152 = vector.shape_cast %149 : vector<32x32xf32> to vector<1x32x32xf32>
    tpu.vector_store %arg13[%c0_52, %c0_53, %c0_54], %152 {strides = array<i32>} : memref<1x32x32xf32, #tpu.memory_space<vmem>>, vector<1x32x32xf32>,
    return
  }
  func.func @transform_0(%arg0: i32) -> (i32, i32, i32) {
    %c0_i32 = arith.constant 0 : i32
    %c0_i32_0 = arith.constant 0 : i32
    %c0_i32_1 = arith.constant 0 : i32
    return %arg0, %c0_i32, %c0_i32_0 : i32, i32, i32
  }
  func.func @transform_1(%arg0: i32) -> (i32, i32, i32) {
    %c0_i32 = arith.constant 0 : i32
    %c0_i32_0 = arith.constant 0 : i32
    %c0_i32_1 = arith.constant 0 : i32
    return %arg0, %c0_i32, %c0_i32_0 : i32, i32, i32
  }
  func.func @transform_2(%arg0: i32) -> (i32, i32) {
    %c0_i32 = arith.constant 0 : i32
    %c0_i32_0 = arith.constant 0 : i32
    %c0_i32_1 = arith.constant 0 : i32
    return %c0_i32, %c0_i32_0 : i32, i32
  }
  func.func @transform_3(%arg0: i32) -> (i32, i32) {
    %c0_i32 = arith.constant 0 : i32
    %c0_i32_0 = arith.constant 0 : i32
    %c0_i32_1 = arith.constant 0 : i32
    return %c0_i32, %c0_i32_0 : i32, i32
  }
  func.func @transform_4(%arg0: i32) -> (i32, i32) {
    %c0_i32 = arith.constant 0 : i32
    %c0_i32_0 = arith.constant 0 : i32
    %c0_i32_1 = arith.constant 0 : i32
    return %c0_i32, %c0_i32_0 : i32, i32
  }
  func.func @transform_5(%arg0: i32) -> (i32, i32) {
    %c0_i32 = arith.constant 0 : i32
    %c0_i32_0 = arith.constant 0 : i32
    %c0_i32_1 = arith.constant 0 : i32
    return %c0_i32, %c0_i32_0 : i32, i32
  }
  func.func @transform_6(%arg0: i32) -> (i32, i32) {
    %c0_i32 = arith.constant 0 : i32
    %c0_i32_0 = arith.constant 0 : i32
    %c0_i32_1 = arith.constant 0 : i32
    return %c0_i32, %c0_i32_0 : i32, i32
  }
  func.func @transform_7(%arg0: i32) -> (i32, i32) {
    %c0_i32 = arith.constant 0 : i32
    %c0_i32_0 = arith.constant 0 : i32
    %c0_i32_1 = arith.constant 0 : i32
    return %c0_i32, %c0_i32_0 : i32, i32
  }
  func.func @transform_8(%arg0: i32) -> (i32, i32) {
    %c0_i32 = arith.constant 0 : i32
    %c0_i32_0 = arith.constant 0 : i32
    %c0_i32_1 = arith.constant 0 : i32
    return %c0_i32, %c0_i32_0 : i32, i32
  }
  func.func @transform_9(%arg0: i32) -> (i32, i32) {
    %c0_i32 = arith.constant 0 : i32
    %c0_i32_0 = arith.constant 0 : i32
    %c0_i32_1 = arith.constant 0 : i32
    return %c0_i32, %c0_i32_0 : i32, i32
  }
  func.func @transform_10(%arg0: i32) -> (i32, i32, i32) {
    %c0_i32 = arith.constant 0 : i32
    %c0_i32_0 = arith.constant 0 : i32
    %c0_i32_1 = arith.constant 0 : i32
    %c0_i32_2 = arith.constant 0 : i32
    return %c0_i32, %c0_i32_0, %c0_i32_1 : i32, i32, i32
  }
  func.func @transform_11(%arg0: i32) -> (i32, i32, i32) {
    %c0_i32 = arith.constant 0 : i32
    %c0_i32_0 = arith.constant 0 : i32
    %c0_i32_1 = arith.constant 0 : i32
    return %arg0, %c0_i32, %c0_i32_0 : i32, i32, i32
  }
  func.func @transform_12(%arg0: i32) -> (i32, i32, i32) {
    %c0_i32 = arith.constant 0 : i32
    %c0_i32_0 = arith.constant 0 : i32
    %c0_i32_1 = arith.constant 0 : i32
    return %arg0, %c0_i32, %c0_i32_0 : i32, i32, i32
  }
}

</mosaic_0001>

<llo_original>
// kernel: encoder_forward.1
$region0: #{encoder_forward.1}
  #allocation0 [shape = 'u32[]', space=smem, size = 0x4, offset = 0x4, fixed_abs, tag = 'smem constant byte address 0x4 - core index']
  #allocation1 [shape = 'u32[144,128]{1,0:T(1,128)}', space=vmem, size = 0x12000, scoped, tag = 'internal scratch']
  %s0 = inlined_call_operand.hbm [shape: f32[2,16,32], index: 0, kind: input, shape index: {}]
  %s1 = inlined_call_operand.hbm [shape: f32[2,32,32], index: 1, kind: input, shape index: {}]
  %s2 = inlined_call_operand.hbm [shape: f32[32,192], index: 2, kind: input, shape index: {}]
  %s3 = inlined_call_operand.vmem [shape: f32[1,192], index: 3, kind: input, shape index: {}]
  %s4 = inlined_call_operand.hbm [shape: f32[32,64], index: 4, kind: input, shape index: {}]
  %s5 = inlined_call_operand.vmem [shape: f32[1,64], index: 5, kind: input, shape index: {}]
  %s6 = inlined_call_operand.hbm [shape: f32[32,192], index: 6, kind: input, shape index: {}]
  %s7 = inlined_call_operand.hbm [shape: f32[1,192], index: 7, kind: input, shape index: {}]
  %s8 = inlined_call_operand.hbm [shape: f32[32,64], index: 8, kind: input, shape index: {}]
  %s9 = inlined_call_operand.vmem [shape: f32[1,64], index: 9, kind: input, shape index: {}]
  %s10 = inlined_call_operand.hbm [shape: f32[4,32,32], index: 10, kind: input, shape index: {}]
  %s11 = inlined_call_operand.hbm [shape: f32[2,16,32], index: 11, kind: output, shape index: {0}]
  %s12 = inlined_call_operand.hbm [shape: f32[2,32,32], index: 12, kind: output, shape index: {1}]
  %13 = xla_tuple %s11, %s12
  %s14 = sld [smem:[#allocation0]]
  $region117: #{encoder_forward.1} parent=0
    _
  %s16 = ssub.s32 1, %s14
  %s17 = scalar_select 0, %s16, %s14
  $region1: #{encoder_forward.1} parent=0
    #allocation2 [shape = 'u8[16384]{0}', space=vmem, size = 0x4000, scoped, tag = 'input window, operand 0']
    #allocation3 [shape = 's32[2]{0}', space=sflag, size = 0x8, scoped, tag = 'scoped memory for encoder_forward.1']
    #allocation4 [shape = 's32[2]{0}', space=sflag, size = 0x8, scoped, tag = 'scoped memory for encoder_forward.1']
    #allocation5 [shape = 'u8[32768]{0}', space=vmem, size = 0x8000, scoped, tag = 'input window, operand 1']
    #allocation6 [shape = 's32[2]{0}', space=sflag, size = 0x8, scoped, tag = 'scoped memory for encoder_forward.1']
    #allocation7 [shape = 'u8[32768]{0}', space=vmem, size = 0x8000, scoped, tag = 'input window, operand 2, single buffered']
    #allocation8 [shape = 'u8[16384]{0}', space=vmem, size = 0x4000, scoped, tag = 'input window, operand 4, single buffered']
    #allocation9 [shape = 's32[1]{0}', space=sflag, size = 0x4, scoped, tag = 'scoped memory for encoder_forward.1']
    #allocation10 [shape = 'u8[32768]{0}', space=vmem, size = 0x8000, scoped, tag = 'input window, operand 6, single buffered']
    #allocation11 [shape = 'u8[1024]{0}', space=vmem, size = 0x400, scoped, tag = 'input window, operand 7, single buffered']
    #allocation12 [shape = 's32[1]{0}', space=sflag, size = 0x4, scoped, tag = 'scoped memory for encoder_forward.1']
    #allocation13 [shape = 'u8[16384]{0}', space=vmem, size = 0x4000, scoped, tag = 'input window, operand 8, single buffered']
    #allocation14 [shape = 'u8[65536]{0}', space=vmem, size = 0x10000, scoped, tag = 'input window, operand 10, single buffered']
    #allocation15 [shape = 's32[1]{0}', space=sflag, size = 0x4, scoped, tag = 'scoped memory for encoder_forward.1']
    #allocation16 [shape = 'u8[16384]{0}', space=vmem, size = 0x4000, scoped, tag = 'output window, operand 0']
    #allocation17 [shape = 'u8[32768]{0}', space=vmem, size = 0x8000, scoped, tag = 'output window, operand 1']
    #allocation18 [shape = 's32[2]{0}', space=sflag, size = 0x8, scoped, tag = 'scoped memory for encoder_forward.1']
    %18 = vsyncpa [#allocation3], 0
    %s19 = scalar_lea.sflag [#allocation3], 1
    %20 = vsyncpa %s19, 0
    %21 = vsyncpa [#allocation6], 0
    %s22 = scalar_lea.sflag [#allocation6], 1
    %23 = vsyncpa %s22, 0
    %24 = vsyncpa [#allocation9], 0
    %25 = vsyncpa [#allocation12], 0
    %26 = vsyncpa [#allocation15], 0
    %27 = vsyncpa [#allocation4], 0
    %s28 = scalar_lea.sflag [#allocation4], 1
    %29 = vsyncpa %s28, 0
    %30 = vsyncpa [#allocation18], 0
    %s31 = scalar_lea.sflag [#allocation18], 1
    %32 = vsyncpa %s31, 0
    loop: start=0, step=1, limit=4
    $region2: #{encoder_forward.1} parent=1 // loop_pre_header
      _
    $region3: #{encoder_forward.1} parent=1 // loop_header
      %s34 = sphi 0, %s38
      %p35 = scmp.ge.s32.totalorder %s34, 4
      %s44 = sphi 0, %s46
      %s47 = sphi 0, %s44
      %s48 = sphi 0, %s47
      %s64 = sphi 0, %s48
      %s70 = sphi 0, %s72
      %s73 = sphi 0, %s70
      %s74 = sphi 0, %s73
      %s90 = sphi 0, %s74
      %s94 = sphi 0, %s94
      %s96 = sphi 0, %s94
      %s97 = sphi 0, %s96
      %s111 = sphi 0, %s97
      %s115 = sphi 0, %s115
      %s117 = sphi 0, %s115
      %s118 = sphi 0, %s117
      %s132 = sphi 0, %s118
      %s136 = sphi 0, %s136
      %s138 = sphi 0, %s136
      %s139 = sphi 0, %s138
      %s153 = sphi 0, %s139
      %s157 = sphi 0, %s157
      %s159 = sphi 0, %s157
      %s160 = sphi 0, %s159
      %s174 = sphi 0, %s160
      %s178 = sphi 0, %s178
      %s180 = sphi 0, %s178
      %s181 = sphi 0, %s180
      %s195 = sphi 0, %s181
      %s199 = sphi 0, %s199
      %s201 = sphi 0, %s199
      %s202 = sphi 0, %s201
      %s216 = sphi 0, %s202
      %s220 = sphi 0, %s220
      %s222 = sphi 0, %s220
      %s223 = sphi 0, %s222
      %s237 = sphi 0, %s223
      %s241 = sphi 0, %s241
      %s243 = sphi 0, %s241
      %s244 = sphi 0, %s243
      %s258 = sphi 0, %s244
      %s262 = sphi 0, %s262
      %s264 = sphi 0, %s262
      %s265 = sphi 0, %s264
      %s279 = sphi 0, %s265
      %s285 = sphi 0, %s287
      %s288 = sphi 0, %s285
      %s289 = sphi 0, %s288
      %s305 = sphi 0, %s289
      %s311 = sphi 0, %s313
      %s314 = sphi 0, %s311
      %s315 = sphi 0, %s314
      %s331 = sphi 0, %s315
    $region4: #{encoder_forward.1} parent=1 // loop_header_branch
      %37 = sbr.rel (%p35) target = $region8
    $region5: #{encoder_forward.1} parent=1 // loop_body
      %s39 = ssub.s32 %s34, 1
      %s40 = ssub.s32 %s34, 2
      %s41 = sadd.s32 %s34, 1
      %s42 = ssub.s32 %s34, %s41
      %p43 = scmp.eq.s32.totalorder %s42, 0
      %s45 = sadd.s32 %s44, 1
      %s46 = scalar_select %p43, %s44, %s45
      %p49 = pneg %p43
      %p50 = scmp.eq.s32.totalorder %s34, 1
      %p51 = por %p49, %p50
      %p52 = scmp.ne.s32.totalorder %s44, %s47
      %p53 = scmp.eq.s32.totalorder %s34, 0
      %p54 = por %p52, %p53
      %p55 = scmp.ne.s32.totalorder %s44, %s47
      %p56 = scmp.eq.s32.totalorder %s39, 1
      %p57 = por %p55, %p56
      %p58 = scmp.ne.s32.totalorder %s47, %s48
      %p59 = scmp.eq.s32.totalorder %s39, 0
      %p60 = por %p58, %p59
      %p61 = scmp.ne.s32.totalorder %s47, %s48
      %p62 = scmp.eq.s32.totalorder %s40, 1
      %p63 = por %p61, %p62
      %p65 = scmp.ne.s32.totalorder %s48, %s64
      %p66 = scmp.eq.s32.totalorder %s40, 0
      %p67 = por %p65, %p66
      %s68 = ssub.s32 %s34, %s41
      %p69 = scmp.eq.s32.totalorder %s68, 0
      %s71 = sadd.s32 %s70, 1
      %s72 = scalar_select %p69, %s70, %s71
      %p75 = pneg %p69
      %p76 = scmp.eq.s32.totalorder %s34, 1
      %p77 = por %p75, %p76
      %p78 = scmp.ne.s32.totalorder %s70, %s73
      %p79 = scmp.eq.s32.totalorder %s34, 0
      %p80 = por %p78, %p79
      %p81 = scmp.ne.s32.totalorder %s70, %s73
      %p82 = scmp.eq.s32.totalorder %s39, 1
      %p83 = por %p81, %p82
      %p84 = scmp.ne.s32.totalorder %s73, %s74
      %p85 = scmp.eq.s32.totalorder %s39, 0
      %p86 = por %p84, %p85
      %p87 = scmp.ne.s32.totalorder %s73, %s74
      %p88 = scmp.eq.s32.totalorder %s40, 1
      %p89 = por %p87, %p88
      %p91 = scmp.ne.s32.totalorder %s74, %s90
      %p92 = scmp.eq.s32.totalorder %s40, 0
      %p93 = por %p91, %p92
      %s95 = sadd.s32 %s94, 1
      %p98 = scmp.eq.s32.totalorder %s34, 1
      %p99 = scmp.ne.s32.totalorder %s94, %s96
      %p100 = scmp.eq.s32.totalorder %s34, 0
      %p101 = por %p99, %p100
      %p102 = scmp.ne.s32.totalorder %s94, %s96
      %p103 = scmp.eq.s32.totalorder %s39, 1
      %p104 = por %p102, %p103
      %p105 = scmp.ne.s32.totalorder %s96, %s97
      %p106 = scmp.eq.s32.totalorder %s39, 0
      %p107 = por %p105, %p106
      %p108 = scmp.ne.s32.totalorder %s96, %s97
      %p109 = scmp.eq.s32.totalorder %s40, 1
      %p110 = por %p108, %p109
      %p112 = scmp.ne.s32.totalorder %s97, %s111
      %p113 = scmp.eq.s32.totalorder %s40, 0
      %p114 = por %p112, %p113
      %s116 = sadd.s32 %s115, 1
      %p119 = scmp.eq.s32.totalorder %s34, 1
      %p120 = scmp.ne.s32.totalorder %s115, %s117
      %p121 = scmp.eq.s32.totalorder %s34, 0
      %p122 = por %p120, %p121
      %p123 = scmp.ne.s32.totalorder %s115, %s117
      %p124 = scmp.eq.s32.totalorder %s39, 1
      %p125 = por %p123, %p124
      %p126 = scmp.ne.s32.totalorder %s117, %s118
      %p127 = scmp.eq.s32.totalorder %s39, 0
      %p128 = por %p126, %p127
      %p129 = scmp.ne.s32.totalorder %s117, %s118
      %p130 = scmp.eq.s32.totalorder %s40, 1
      %p131 = por %p129, %p130
      %p133 = scmp.ne.s32.totalorder %s118, %s132
      %p134 = scmp.eq.s32.totalorder %s40, 0
      %p135 = por %p133, %p134
      %s137 = sadd.s32 %s136, 1
      %p140 = scmp.eq.s32.totalorder %s34, 1
      %p141 = scmp.ne.s32.totalorder %s136, %s138
      %p142 = scmp.eq.s32.totalorder %s34, 0
      %p143 = por %p141, %p142
      %p144 = scmp.ne.s32.totalorder %s136, %s138
      %p145 = scmp.eq.s32.totalorder %s39, 1
      %p146 = por %p144, %p145
      %p147 = scmp.ne.s32.totalorder %s138, %s139
      %p148 = scmp.eq.s32.totalorder %s39, 0
      %p149 = por %p147, %p148
      %p150 = scmp.ne.s32.totalorder %s138, %s139
      %p151 = scmp.eq.s32.totalorder %s40, 1
      %p152 = por %p150, %p151
      %p154 = scmp.ne.s32.totalorder %s139, %s153
      %p155 = scmp.eq.s32.totalorder %s40, 0
      %p156 = por %p154, %p155
      %s158 = sadd.s32 %s157, 1
      %p161 = scmp.eq.s32.totalorder %s34, 1
      %p162 = scmp.ne.s32.totalorder %s157, %s159
      %p163 = scmp.eq.s32.totalorder %s34, 0
      %p164 = por %p162, %p163
      %p165 = scmp.ne.s32.totalorder %s157, %s159
      %p166 = scmp.eq.s32.totalorder %s39, 1
      %p167 = por %p165, %p166
      %p168 = scmp.ne.s32.totalorder %s159, %s160
      %p169 = scmp.eq.s32.totalorder %s39, 0
      %p170 = por %p168, %p169
      %p171 = scmp.ne.s32.totalorder %s159, %s160
      %p172 = scmp.eq.s32.totalorder %s40, 1
      %p173 = por %p171, %p172
      %p175 = scmp.ne.s32.totalorder %s160, %s174
      %p176 = scmp.eq.s32.totalorder %s40, 0
      %p177 = por %p175, %p176
      %s179 = sadd.s32 %s178, 1
      %p182 = scmp.eq.s32.totalorder %s34, 1
      %p183 = scmp.ne.s32.totalorder %s178, %s180
      %p184 = scmp.eq.s32.totalorder %s34, 0
      %p185 = por %p183, %p184
      %p186 = scmp.ne.s32.totalorder %s178, %s180
      %p187 = scmp.eq.s32.totalorder %s39, 1
      %p188 = por %p186, %p187
      %p189 = scmp.ne.s32.totalorder %s180, %s181
      %p190 = scmp.eq.s32.totalorder %s39, 0
      %p191 = por %p189, %p190
      %p192 = scmp.ne.s32.totalorder %s180, %s181
      %p193 = scmp.eq.s32.totalorder %s40, 1
      %p194 = por %p192, %p193
      %p196 = scmp.ne.s32.totalorder %s181, %s195
      %p197 = scmp.eq.s32.totalorder %s40, 0
      %p198 = por %p196, %p197
      %s200 = sadd.s32 %s199, 1
      %p203 = scmp.eq.s32.totalorder %s34, 1
      %p204 = scmp.ne.s32.totalorder %s199, %s201
      %p205 = scmp.eq.s32.totalorder %s34, 0
      %p206 = por %p204, %p205
      %p207 = scmp.ne.s32.totalorder %s199, %s201
      %p208 = scmp.eq.s32.totalorder %s39, 1
      %p209 = por %p207, %p208
      %p210 = scmp.ne.s32.totalorder %s201, %s202
      %p211 = scmp.eq.s32.totalorder %s39, 0
      %p212 = por %p210, %p211
      %p213 = scmp.ne.s32.totalorder %s201, %s202
      %p214 = scmp.eq.s32.totalorder %s40, 1
      %p215 = por %p213, %p214
      %p217 = scmp.ne.s32.totalorder %s202, %s216
      %p218 = scmp.eq.s32.totalorder %s40, 0
      %p219 = por %p217, %p218
      %s221 = sadd.s32 %s220, 1
      %p224 = scmp.eq.s32.totalorder %s34, 1
      %p225 = scmp.ne.s32.totalorder %s220, %s222
      %p226 = scmp.eq.s32.totalorder %s34, 0
      %p227 = por %p225, %p226
      %p228 = scmp.ne.s32.totalorder %s220, %s222
      %p229 = scmp.eq.s32.totalorder %s39, 1
      %p230 = por %p228, %p229
      %p231 = scmp.ne.s32.totalorder %s222, %s223
      %p232 = scmp.eq.s32.totalorder %s39, 0
      %p233 = por %p231, %p232
      %p234 = scmp.ne.s32.totalorder %s222, %s223
      %p235 = scmp.eq.s32.totalorder %s40, 1
      %p236 = por %p234, %p235
      %p238 = scmp.ne.s32.totalorder %s223, %s237
      %p239 = scmp.eq.s32.totalorder %s40, 0
      %p240 = por %p238, %p239
      %s242 = sadd.s32 %s241, 1
      %p245 = scmp.eq.s32.totalorder %s34, 1
      %p246 = scmp.ne.s32.totalorder %s241, %s243
      %p247 = scmp.eq.s32.totalorder %s34, 0
      %p248 = por %p246, %p247
      %p249 = scmp.ne.s32.totalorder %s241, %s243
      %p250 = scmp.eq.s32.totalorder %s39, 1
      %p251 = por %p249, %p250
      %p252 = scmp.ne.s32.totalorder %s243, %s244
      %p253 = scmp.eq.s32.totalorder %s39, 0
      %p254 = por %p252, %p253
      %p255 = scmp.ne.s32.totalorder %s243, %s244
      %p256 = scmp.eq.s32.totalorder %s40, 1
      %p257 = por %p255, %p256
      %p259 = scmp.ne.s32.totalorder %s244, %s258
      %p260 = scmp.eq.s32.totalorder %s40, 0
      %p261 = por %p259, %p260
      %s263 = sadd.s32 %s262, 1
      %p266 = scmp.eq.s32.totalorder %s34, 1
      %p267 = scmp.ne.s32.totalorder %s262, %s264
      %p268 = scmp.eq.s32.totalorder %s34, 0
      %p269 = por %p267, %p268
      %p270 = scmp.ne.s32.totalorder %s262, %s264
      %p271 = scmp.eq.s32.totalorder %s39, 1
      %p272 = por %p270, %p271
      %p273 = scmp.ne.s32.totalorder %s264, %s265
      %p274 = scmp.eq.s32.totalorder %s39, 0
      %p275 = por %p273, %p274
      %p276 = scmp.ne.s32.totalorder %s264, %s265
      %p277 = scmp.eq.s32.totalorder %s40, 1
      %p278 = por %p276, %p277
      %p280 = scmp.ne.s32.totalorder %s265, %s279
      %p281 = scmp.eq.s32.totalorder %s40, 0
      %p282 = por %p280, %p281
      %s283 = ssub.s32 %s34, %s41
      %p284 = scmp.eq.s32.totalorder %s283, 0
      %s286 = sadd.s32 %s285, 1
      %s287 = scalar_select %p284, %s285, %s286
      %p290 = pneg %p284
      %p291 = scmp.eq.s32.totalorder %s34, 1
      %p292 = por %p290, %p291
      %p293 = scmp.ne.s32.totalorder %s285, %s288
      %p294 = scmp.eq.s32.totalorder %s34, 0
      %p295 = por %p293, %p294
      %p296 = scmp.ne.s32.totalorder %s285, %s288
      %p297 = scmp.eq.s32.totalorder %s39, 1
      %p298 = por %p296, %p297
      %p299 = scmp.ne.s32.totalorder %s288, %s289
      %p300 = scmp.eq.s32.totalorder %s39, 0
      %p301 = por %p299, %p300
      %p302 = scmp.ne.s32.totalorder %s288, %s289
      %p303 = scmp.eq.s32.totalorder %s40, 1
      %p304 = por %p302, %p303
      %p306 = scmp.ne.s32.totalorder %s289, %s305
      %p307 = scmp.eq.s32.totalorder %s40, 0
      %p308 = por %p306, %p307
      %s309 = ssub.s32 %s34, %s41
      %p310 = scmp.eq.s32.totalorder %s309, 0
      %s312 = sadd.s32 %s311, 1
      %s313 = scalar_select %p310, %s311, %s312
      %p316 = pneg %p310
      %p317 = scmp.eq.s32.totalorder %s34, 1
      %p318 = por %p316, %p317
      %p319 = scmp.ne.s32.totalorder %s311, %s314
      %p320 = scmp.eq.s32.totalorder %s34, 0
      %p321 = por %p319, %p320
      %p322 = scmp.ne.s32.totalorder %s311, %s314
      %p323 = scmp.eq.s32.totalorder %s39, 1
      %p324 = por %p322, %p323
      %p325 = scmp.ne.s32.totalorder %s314, %s315
      %p326 = scmp.eq.s32.totalorder %s39, 0
      %p327 = por %p325, %p326
      %p328 = scmp.ne.s32.totalorder %s314, %s315
      %p329 = scmp.eq.s32.totalorder %s40, 1
      %p330 = por %p328, %p329
      %p332 = scmp.ne.s32.totalorder %s315, %s331
      %p333 = scmp.eq.s32.totalorder %s40, 0
      %p334 = por %p332, %p333
      %p335 = scmp.le.s32.totalorder 1, %s34
      %p336 = scmp.lt.s32.totalorder %s34, 3
      %p337 = pnand %p335, %p336
      %p338 = pneg %p337
      // Predicated region
      $region9: #{encoder_forward.1} parent=5 // pred_check
        _
      $region10: #{encoder_forward.1} parent=5 // pred_check_branch
        %340 = sbr.rel (%p337) target = $region12
      $region11: #{encoder_forward.1} parent=5 // pred_region
        %s341 = ssub.s32 %s34, 1
        // Predicated region
        $region13: #{encoder_forward.1} parent=11 // pred_check
          %p342 = pneg %p107
        $region14: #{encoder_forward.1} parent=11 // pred_check_branch
          %344 = sbr.rel (%p342) target = $region16
        $region15: #{encoder_forward.1} parent=11 // pred_region
          %s346 = ssub.s32 1024, 1024
          %347 = vsyncadd [#allocation6], %s346
          %s348 = sshll.u32 [#allocation7], 4
          %s349 = int_to_ptr.vmem [resolvable:$true] %s348
          %354 = dma.hbm_to_vmem [thread:$0]  %s2, 1024, %s349, [#allocation6], 256, 256, 16
        $region16: #{encoder_forward.1} parent=11 // pred_fallthru
          _
        // Predicated region
        $region17: #{encoder_forward.1} parent=11 // pred_check
          %p355 = pneg %p128
        $region18: #{encoder_forward.1} parent=11 // pred_check_branch
          %357 = sbr.rel (%p355) target = $region20
        $region19: #{encoder_forward.1} parent=11 // pred_region
          _
        $region20: #{encoder_forward.1} parent=11 // pred_fallthru
          _
        // Predicated region
        $region21: #{encoder_forward.1} parent=11 // pred_check
          %p358 = pneg %p149
        $region22: #{encoder_forward.1} parent=11 // pred_check_branch
          %360 = sbr.rel (%p358) target = $region24
        $region23: #{encoder_forward.1} parent=11 // pred_region
          %s362 = ssub.s32 512, 512
          %363 = vsyncadd [#allocation9], %s362
          %s364 = sshll.u32 [#allocation8], 4
          %s365 = int_to_ptr.vmem [resolvable:$true] %s364
          %370 = dma.hbm_to_vmem [thread:$0]  %s4, 512, %s365, [#allocation9], 128, 128, 8
        $region24: #{encoder_forward.1} parent=11 // pred_fallthru
          _
        // Predicated region
        $region25: #{encoder_forward.1} parent=11 // pred_check
          %p371 = pneg %p170
        $region26: #{encoder_forward.1} parent=11 // pred_check_branch
          %373 = sbr.rel (%p371) target = $region28
        $region27: #{encoder_forward.1} parent=11 // pred_region
          _
        $region28: #{encoder_forward.1} parent=11 // pred_fallthru
          _
        // Predicated region
        $region29: #{encoder_forward.1} parent=11 // pred_check
          %p374 = pneg %p191
        $region30: #{encoder_forward.1} parent=11 // pred_check_branch
          %376 = sbr.rel (%p374) target = $region32
        $region31: #{encoder_forward.1} parent=11 // pred_region
          %s378 = ssub.s32 1024, 1024
          %379 = vsyncadd [#allocation9], %s378
          %s380 = sshll.u32 [#allocation10], 4
          %s381 = int_to_ptr.vmem [resolvable:$true] %s380
          %386 = dma.hbm_to_vmem [thread:$0]  %s6, 1024, %s381, [#allocation9], 256, 256, 16
        $region32: #{encoder_forward.1} parent=11 // pred_fallthru
          _
        // Predicated region
        $region33: #{encoder_forward.1} parent=11 // pred_check
          %p387 = pneg %p212
        $region34: #{encoder_forward.1} parent=11 // pred_check_branch
          %389 = sbr.rel (%p387) target = $region36
        $region35: #{encoder_forward.1} parent=11 // pred_region
          %s391 = ssub.s32 32, 32
          %392 = vsyncadd [#allocation12], %s391
          %s394 = sshll.u32 [#allocation11], 4
          %s395 = int_to_ptr.vmem [resolvable:$true] %s394
          %397 = dma.hbm_to_vmem [thread:$0]  %s7, 32, %s395, [#allocation12]
        $region36: #{encoder_forward.1} parent=11 // pred_fallthru
          _
        // Predicated region
        $region37: #{encoder_forward.1} parent=11 // pred_check
          %p398 = pneg %p233
        $region38: #{encoder_forward.1} parent=11 // pred_check_branch
          %400 = sbr.rel (%p398) target = $region40
        $region39: #{encoder_forward.1} parent=11 // pred_region
          %s402 = ssub.s32 512, 512
          %403 = vsyncadd [#allocation12], %s402
          %s404 = sshll.u32 [#allocation13], 4
          %s405 = int_to_ptr.vmem [resolvable:$true] %s404
          %410 = dma.hbm_to_vmem [thread:$0]  %s8, 512, %s405, [#allocation12], 128, 128, 8
        $region40: #{encoder_forward.1} parent=11 // pred_fallthru
          _
        // Predicated region
        $region41: #{encoder_forward.1} parent=11 // pred_check
          %p411 = pneg %p254
        $region42: #{encoder_forward.1} parent=11 // pred_check_branch
          %413 = sbr.rel (%p411) target = $region44
        $region43: #{encoder_forward.1} parent=11 // pred_region
          _
        $region44: #{encoder_forward.1} parent=11 // pred_fallthru
          _
        // Predicated region
        $region45: #{encoder_forward.1} parent=11 // pred_check
          %p414 = pneg %p275
        $region46: #{encoder_forward.1} parent=11 // pred_check_branch
          %416 = sbr.rel (%p414) target = $region48
        $region47: #{encoder_forward.1} parent=11 // pred_region
          %s418 = ssub.s32 2048, 2048
          %419 = vsyncadd [#allocation15], %s418
          %s420 = sshll.u32 [#allocation14], 4
          %s421 = int_to_ptr.vmem [resolvable:$true] %s420
          %426 = dma.hbm_to_vmem [thread:$0]  %s10, 2048, %s421, [#allocation15], 128, 128, 8
        $region48: #{encoder_forward.1} parent=11 // pred_fallthru
          _
      $region12: #{encoder_forward.1} parent=5 // pred_fallthru
        _
      %p427 = scmp.lt.s32.totalorder %s34, 2
      // Predicated region
      $region49: #{encoder_forward.1} parent=5 // pred_check
        %p428 = pneg %p427
      $region50: #{encoder_forward.1} parent=5 // pred_check_branch
        %430 = sbr.rel (%p428) target = $region52
      $region51: #{encoder_forward.1} parent=5 // pred_region
        // Predicated region
        $region53: #{encoder_forward.1} parent=51 // pred_check
          %p431 = pneg %p54
        $region54: #{encoder_forward.1} parent=51 // pred_check_branch
          %433 = sbr.rel (%p431) target = $region56
        $region55: #{encoder_forward.1} parent=51 // pred_region
          %s434 = sand.u32 %s44, 1
          %s435 = scalar_lea.sflag [#allocation3], %s434
          %s436 = sand.u32 %s44, 1
          %s437 = smul.addr %s436, 16
          %s438 = scalar_lea.vmem [#allocation2], %s437
          %s440 = ssub.s32 256, 256
          %441 = vsyncadd %s435, %s440
          %s442 = smul.addr %s34, 2
          %s443 = smul.addr %s442, 128
          %s444 = scalar_lea.hbm %s0, %s443
          %s445 = sshll.u32 %s438, 4
          %s446 = int_to_ptr.vmem [resolvable:$true] %s445
          %451 = dma.hbm_to_vmem [thread:$0]  %s444, 256, %s446, %s435, 128, 128, 8
        $region56: #{encoder_forward.1} parent=51 // pred_fallthru
          _
        // Predicated region
        $region57: #{encoder_forward.1} parent=51 // pred_check
          %p452 = pneg %p80
        $region58: #{encoder_forward.1} parent=51 // pred_check_branch
          %454 = sbr.rel (%p452) target = $region60
        $region59: #{encoder_forward.1} parent=51 // pred_region
          %s455 = sand.u32 %s34, 1
          %s456 = scalar_lea.sflag [#allocation6], %s455
          %s457 = sand.u32 %s70, 1
          %s458 = smul.addr %s457, 32
          %s459 = scalar_lea.vmem [#allocation5], %s458
          %s461 = ssub.s32 512, 512
          %462 = vsyncadd %s456, %s461
          %s463 = smul.addr %s34, 4
          %s464 = smul.addr %s463, 128
          %s465 = scalar_lea.hbm %s1, %s464
          %s466 = sshll.u32 %s459, 4
          %s467 = int_to_ptr.vmem [resolvable:$true] %s466
          %472 = dma.hbm_to_vmem [thread:$0]  %s465, 512, %s467, %s456, 128, 128, 8
        $region60: #{encoder_forward.1} parent=51 // pred_fallthru
          _
      $region52: #{encoder_forward.1} parent=5 // pred_fallthru
        _
      %p473 = scmp.le.s32.totalorder 1, %s34
      %p474 = scmp.lt.s32.totalorder %s34, 3
      %p475 = pnand %p473, %p474
      %p476 = pneg %p475
      // Predicated region
      $region61: #{encoder_forward.1} parent=5 // pred_check
        _
      $region62: #{encoder_forward.1} parent=5 // pred_check_branch
        %478 = sbr.rel (%p475) target = $region64
      $region63: #{encoder_forward.1} parent=5 // pred_region
        %s479 = ssub.s32 %s34, 1
        %s480 = sand.u32 %s47, 1
        %s481 = scalar_lea.sflag [#allocation3], %s480
        %s482 = sand.u32 %s47, 1
        %s483 = smul.addr %s482, 16
        %s484 = scalar_lea.vmem [#allocation2], %s483
        // Predicated region
        $region65: #{encoder_forward.1} parent=63 // pred_check
          %p485 = pneg %p60
        $region66: #{encoder_forward.1} parent=63 // pred_check_branch
          %487 = sbr.rel (%p485) target = $region68
        $region67: #{encoder_forward.1} parent=63 // pred_region
          %488 = dma.done %s481, 256
        $region68: #{encoder_forward.1} parent=63 // pred_fallthru
          _
        %s489 = sand.u32 %s39, 1
        %s490 = scalar_lea.sflag [#allocation6], %s489
        %s491 = sand.u32 %s73, 1
        %s492 = smul.addr %s491, 32
        %s493 = scalar_lea.vmem [#allocation5], %s492
        // Predicated region
        $region69: #{encoder_forward.1} parent=63 // pred_check
          %p494 = pneg %p86
        $region70: #{encoder_forward.1} parent=63 // pred_check_branch
          %496 = sbr.rel (%p494) target = $region72
        $region71: #{encoder_forward.1} parent=63 // pred_region
          %497 = dma.done %s490, 512
        $region72: #{encoder_forward.1} parent=63 // pred_fallthru
          _
        // Predicated region
        $region73: #{encoder_forward.1} parent=63 // pred_check
          %p498 = pneg %p107
        $region74: #{encoder_forward.1} parent=63 // pred_check_branch
          %500 = sbr.rel (%p498) target = $region76
        $region75: #{encoder_forward.1} parent=63 // pred_region
          %501 = dma.done [#allocation6], 1024
        $region76: #{encoder_forward.1} parent=63 // pred_fallthru
          _
        // Predicated region
        $region77: #{encoder_forward.1} parent=63 // pred_check
          %p502 = pneg %p149
        $region78: #{encoder_forward.1} parent=63 // pred_check_branch
          %504 = sbr.rel (%p502) target = $region80
        $region79: #{encoder_forward.1} parent=63 // pred_region
          %505 = dma.done [#allocation9], 512
        $region80: #{encoder_forward.1} parent=63 // pred_fallthru
          _
        // Predicated region
        $region81: #{encoder_forward.1} parent=63 // pred_check
          %p506 = pneg %p191
        $region82: #{encoder_forward.1} parent=63 // pred_check_branch
          %508 = sbr.rel (%p506) target = $region84
        $region83: #{encoder_forward.1} parent=63 // pred_region
          %509 = dma.done [#allocation9], 1024
        $region84: #{encoder_forward.1} parent=63 // pred_fallthru
          _
        // Predicated region
        $region85: #{encoder_forward.1} parent=63 // pred_check
          %p510 = pneg %p212
        $region86: #{encoder_forward.1} parent=63 // pred_check_branch
          %512 = sbr.rel (%p510) target = $region88
        $region87: #{encoder_forward.1} parent=63 // pred_region
          %513 = dma.done [#allocation12], 32
        $region88: #{encoder_forward.1} parent=63 // pred_fallthru
          _
        // Predicated region
        $region89: #{encoder_forward.1} parent=63 // pred_check
          %p514 = pneg %p233
        $region90: #{encoder_forward.1} parent=63 // pred_check_branch
          %516 = sbr.rel (%p514) target = $region92
        $region91: #{encoder_forward.1} parent=63 // pred_region
          %517 = dma.done [#allocation12], 512
        $region92: #{encoder_forward.1} parent=63 // pred_fallthru
          _
        // Predicated region
        $region93: #{encoder_forward.1} parent=63 // pred_check
          %p518 = pneg %p275
        $region94: #{encoder_forward.1} parent=63 // pred_check_branch
          %520 = sbr.rel (%p518) target = $region96
        $region95: #{encoder_forward.1} parent=63 // pred_region
          %521 = dma.done [#allocation15], 2048
        $region96: #{encoder_forward.1} parent=63 // pred_fallthru
          _
        %s522 = sand.u32 %s47, 1
        %s523 = scalar_lea.sflag [#allocation3], %s522
        %s524 = sand.u32 %s47, 1
        %s525 = smul.addr %s524, 16
        %s526 = scalar_lea.vmem [#allocation2], %s525
        %p527 = pneg %p60
        %p528 = pneg %p57
        %s529 = sand.u32 %s39, 1
        %s530 = scalar_lea.sflag [#allocation6], %s529
        %s531 = sand.u32 %s73, 1
        %s532 = smul.addr %s531, 32
        %s533 = scalar_lea.vmem [#allocation5], %s532
        %p534 = pneg %p86
        %p535 = pneg %p83
        %p536 = pneg %p107
        %p537 = pneg %p104
        %p538 = pneg %p128
        %p539 = pneg %p125
        %p540 = pneg %p149
        %p541 = pneg %p146
        %p542 = pneg %p170
        %p543 = pneg %p167
        %p544 = pneg %p191
        %p545 = pneg %p188
        %p546 = pneg %p212
        %p547 = pneg %p209
        %p548 = pneg %p233
        %p549 = pneg %p230
        %p550 = pneg %p254
        %p551 = pneg %p251
        %p552 = pneg %p275
        %p553 = pneg %p272
        %p554 = pneg %p301
        %p555 = pneg %p298
        %s556 = sand.u32 %s288, 1
        %s557 = scalar_lea.sflag [#allocation4], %s556
        %s558 = sand.u32 %s288, 1
        %s559 = smul.addr %s558, 16
        %s560 = scalar_lea.vmem [#allocation16], %s559
        %p561 = pneg %p327
        %p562 = pneg %p324
        %s563 = sand.u32 %s314, 1
        %s564 = scalar_lea.sflag [#allocation18], %s563
        %s565 = sand.u32 %s314, 1
        %s566 = smul.addr %s565, 32
        %s567 = scalar_lea.vmem [#allocation17], %s566
        %v568 = vld [vmem:[%s484] sm:$0xff]
        %v569 = vld [vmem:[%s484 + $0x8] sm:$0xff]
        %v570 = vld [vmem:[%s493] sm:$0xff]
        %v571 = vld [vmem:[%s493 + $0x8] sm:$0xff]
        %v572 = vld [vmem:[%s493 + $0x10] sm:$0xff]
        %v573 = vld [vmem:[%s493 + $0x18] sm:$0xff]
        %v574 = vld [vmem:[#allocation7] sm:$0xff]
        %v575 = vld [vmem:[#allocation7 + $0x8] sm:$0xff]
        %v576 = vld [vmem:[#allocation7 + $0x10] sm:$0xff]
        %v577 = vld [vmem:[#allocation7 + $0x18] sm:$0xff]
        %v578 = vld [vmem:[#allocation7 + $0x20] sm:$0xff]
        %v579 = vld [vmem:[#allocation7 + $0x28] sm:$0xff]
        %v580 = vld [vmem:[#allocation7 + $0x30] sm:$0xff]
        %v581 = vld [vmem:[#allocation7 + $0x38] sm:$0xff]
        %v582 = vld [vmem:[%s3] sm:$0x3]
        %v584 = vlaneseq
        %v585 = vshrl.u32 %v584, 7
        %v586 = vsub.s32 0, %v585
        %v587 = vrot.slane %v582, %v586
        %v588 = vlaneseq
        %v589 = vshrl.u32 %v588, 7
        %v590 = vsub.s32 1, %v589
        %v591 = vrot.slane %v582, %v590
        %vm594 = vcmask 261120
        %v596 = vsel %vm594, %v568, 0
        %v599 = vsel %vm594, %v569, 0
        %v602 = vsel %vm594, %v570, 0
        %v605 = vsel %vm594, %v571, 0
        %v608 = vsel %vm594, %v572, 0
        %v611 = vsel %vm594, %v573, 0
        %613 = vmatprep.subr.mxu0 0.0
        %614 = vmatpush1.msra.mxu0 0.0
        %615 = vmatprep.subr.mxu0 0.0
        %616 = vmatpush1.msra.mxu0 0.0
        %617 = vmatprep.subr.mxu0 0.0
        %618 = vmatpush1.msra.mxu0 0.0
        %619 = vmatprep.subr.mxu0 0.0
        %620 = vmatpush1.msra.mxu0 0.0
        %621 = vmatprep.subr.mxu0 0.0
        %622 = vmatpush1.msra.mxu0 0.0
        %623 = vmatprep.subr.mxu0 0.0
        %624 = vmatpush1.msra.mxu0 0.0
        %625 = vmatprep.subr.mxu0 0.0
        %626 = vmatpush1.msra.mxu0 0.0
        %627 = vmatprep.subr.mxu0 0.0
        %628 = vmatpush1.msra.mxu0 0.0
        %629 = vmatprep.subr.mxu0 0.0
        %630 = vmatpush1.msra.mxu0 0.0
        %631 = vmatprep.subr.mxu0 0.0
        %632 = vmatpush1.msra.mxu0 0.0
        %633 = vmatprep.subr.mxu0 0.0
        %634 = vmatpush1.msra.mxu0 0.0
        %635 = vmatprep.subr.mxu0 0.0
        %636 = vmatpush1.msra.mxu0 0.0
        %637 = vmatprep.subr.mxu0 %v581
        %638 = vmatpush1.msra.mxu0 %v580
        %639 = vmatprep.subr.mxu0 %v579
        %640 = vmatpush1.msra.mxu0 %v578
        %641 = vmatprep.subr.mxu0 %v577
        %642 = vmatpush1.msra.mxu0 %v576
        %643 = vmatprep.subr.mxu0 %v575
        %644 = vmatpush1.msra.mxu0 %v574
        %645 = vmatprep.subr.mxu0 0.0
        %646 = vmatpush2.msra.mxu0 0.0
        %647 = vmatprep.subr.mxu0 0.0
        %648 = vmatpush2.msra.mxu0 0.0
        %649 = vmatprep.subr.mxu0 0.0
        %650 = vmatpush2.msra.mxu0 0.0
        %651 = vmatprep.subr.mxu0 0.0
        %652 = vmatpush2.msra.mxu0 0.0
        %653 = vmatprep.subr.mxu0 0.0
        %654 = vmatpush2.msra.mxu0 0.0
        %655 = vmatprep.subr.mxu0 0.0
        %656 = vmatpush2.msra.mxu0 0.0
        %657 = vmatprep.subr.mxu0 0.0
        %658 = vmatpush2.msra.mxu0 0.0
        %659 = vmatprep.subr.mxu0 0.0
        %660 = vmatpush2.msra.mxu0 0.0
        %661 = vmatprep.subr.mxu0 0.0
        %662 = vmatpush2.msra.mxu0 0.0
        %663 = vmatprep.subr.mxu0 0.0
        %664 = vmatpush2.msra.mxu0 0.0
        %665 = vmatprep.subr.mxu0 0.0
        %666 = vmatpush2.msra.mxu0 0.0
        %667 = vmatprep.subr.mxu0 0.0
        %668 = vmatpush2.msra.mxu0 0.0
        %669 = vmatprep.subr.mxu0 0.0
        %670 = vmatpush2.msra.mxu0 0.0
        %671 = vmatprep.subr.mxu0 0.0
        %672 = vmatpush2.msra.mxu0 0.0
        %673 = vmatprep.subr.mxu0 0.0
        %674 = vmatpush2.msra.mxu0 0.0
        %675 = vmatprep.subr.mxu0 0.0
        %676 = vmatpush2.msra.mxu0 0.0
        %677 = vmatprep.mubr.f32.mxu0 0.0
        %678 = vmatmul.mubr.f32.gmra.mxu0 %v596
        %v679 = vpop.f32.mrf.mxu0
        %v680 = vadd.f32 %v587, %v679
        %v681 = vpop.f32.mrf.mxu0
        %682 = vmatprep.mubr.f32.mxu0 0.0
        %683 = vmatmul.mubr.f32.gmra.mxu0 %v599
        %v684 = vpop.f32.mrf.mxu0
        %v685 = vadd.f32 %v587, %v684
        %v686 = vpop.f32.mrf.mxu0
        %687 = vmatprep.mubr.f32.mxu0 0.0
        %688 = vmatmul.mubr.f32.gmra.mxu0 %v602
        %v689 = vpop.f32.mrf.mxu0
        %v690 = vadd.f32 %v587, %v689
        %v691 = vpop.f32.mrf.mxu0
        %v692 = vadd.f32 %v591, %v691
        %693 = vmatprep.mubr.f32.mxu0 0.0
        %694 = vmatmul.mubr.f32.gmra.mxu0 %v605
        %v695 = vpop.f32.mrf.mxu0
        %v696 = vadd.f32 %v587, %v695
        %v697 = vpop.f32.mrf.mxu0
        %v698 = vadd.f32 %v591, %v697
        %699 = vmatprep.mubr.f32.mxu0 0.0
        %700 = vmatmul.mubr.f32.gmra.mxu0 %v608
        %v701 = vpop.f32.mrf.mxu0
        %v702 = vadd.f32 %v587, %v701
        %v703 = vpop.f32.mrf.mxu0
        %v704 = vadd.f32 %v591, %v703
        %705 = vmatprep.mubr.f32.mxu0 0.0
        %706 = vmatmul.mubr.f32.gmra.mxu0 %v611
        %v707 = vpop.f32.mrf.mxu0
        %v708 = vadd.f32 %v587, %v707
        %v709 = vpop.f32.mrf.mxu0
        %v710 = vadd.f32 %v591, %v709
        %711 = vdwg.mxu0
        %v712 = vld [vmem:[#allocation14] sm:$0xff]
        %v713 = vld [vmem:[#allocation14 + $0x8] sm:$0xff]
        %vm714 = vcmask 523520
        %v715 = vsel %vm714, %v680, -inf
        %v716 = vsel %vm714, %v685, -inf
        %v717 = vmax.f32 %v715, %v716
        %v718 = vrot.slane %v717, 4
        %v719 = vmax.f32 %v717, %v718
        %v720 = vrot.slane %v719, 2
        %v721 = vmax.f32 %v719, %v720
        %v722 = vrot.slane %v721, 1
        %v723 = vmax.f32 %v721, %v722
        %vm724 = vcmask 130048
        %v725 = vsel %vm724, %v712, -inf
        %726 = vmax.xlane.f32.xlu0 %v725
        %v727 = vpop.xlane.xlu0 %726
        %v728 = vsel %vm724, %v713, -inf
        %729 = vmax.xlane.f32.xlu0 %v728
        %v730 = vpop.xlane.xlu0 %729
        %v731 = vsub.f32 %v680, %v723
        %v732 = vsub.f32 %v685, %v723
        %v733 = vmul.f32 %v731, 1.442695
        %v734 = vpow.pop %v733
        %v735 = vmul.f32 %v732, 1.442695
        %v736 = vpow.pop %v735
        %v737 = vsub.f32 %v712, %v727
        %v738 = vsub.f32 %v713, %v730
        %v739 = vmul.f32 %v737, 1.442695
        %v740 = vpow.pop %v739
        %v741 = vmul.f32 %v738, 1.442695
        %v742 = vpow.pop %v741
        %745 = vrot.lane.b32.xlu0 %v680, 96
        %v746 = vpop.permute.xlu0 %745
        %747 = vrot.lane.b32.xlu0 %v685, 96
        %v748 = vpop.permute.xlu0 %747
        %v751 = vmul.f32 %v734, %v746
        %v752 = vmul.f32 %v736, %v748
        %755 = vrot.lane.b32.xlu0 %v751, 96
        %v756 = vpop.permute.xlu0 %755
        %757 = vrot.lane.b32.xlu0 %v752, 96
        %v758 = vpop.permute.xlu0 %757
        %v761 = vsel %vm594, %v756, %v734
        %v762 = vsel %vm594, %v758, %v736
        %v764 = vsel %vm724, %v740, 0
        %v767 = vsel %vm724, %v742, 0
        %769 = vmatprep.subr.mxu0 0.0
        %770 = vmatpush1.msra.mxu0 0.0
        %771 = vmatprep.subr.mxu0 0.0
        %772 = vmatpush1.msra.mxu0 0.0
        %773 = vmatprep.subr.mxu0 0.0
        %774 = vmatpush1.msra.mxu0 0.0
        %775 = vmatprep.subr.mxu0 0.0
        %776 = vmatpush1.msra.mxu0 0.0
        %777 = vmatprep.subr.mxu0 0.0
        %778 = vmatpush1.msra.mxu0 0.0
        %779 = vmatprep.subr.mxu0 0.0
        %780 = vmatpush1.msra.mxu0 0.0
        %781 = vmatprep.subr.mxu0 0.0
        %782 = vmatpush1.msra.mxu0 0.0
        %783 = vmatprep.subr.mxu0 0.0
        %784 = vmatpush1.msra.mxu0 0.0
        %785 = vmatprep.subr.mxu0 0.0
        %786 = vmatpush1.msra.mxu0 0.0
        %787 = vmatprep.subr.mxu0 0.0
        %788 = vmatpush1.msra.mxu0 0.0
        %789 = vmatprep.subr.mxu0 0.0
        %790 = vmatpush1.msra.mxu0 0.0
        %791 = vmatprep.subr.mxu0 0.0
        %792 = vmatpush1.msra.mxu0 0.0
        %793 = vmatprep.subr.mxu0 0.0
        %794 = vmatpush1.msra.mxu0 0.0
        %795 = vmatprep.subr.mxu0 0.0
        %796 = vmatpush1.msra.mxu0 0.0
        %797 = vmatprep.subr.mxu0 0.0
        %798 = vmatpush1.msra.mxu0 %v762
        %799 = vmatprep.subr.mxu0 0.0
        %800 = vmatpush1.msra.mxu0 %v761
        %801 = vmatprep.subr.mxu0 0.0
        %802 = vmatpush2.msra.mxu0 0.0
        %803 = vmatprep.subr.mxu0 0.0
        %804 = vmatpush2.msra.mxu0 0.0
        %805 = vmatprep.subr.mxu0 0.0
        %806 = vmatpush2.msra.mxu0 0.0
        %807 = vmatprep.subr.mxu0 0.0
        %808 = vmatpush2.msra.mxu0 0.0
        %809 = vmatprep.subr.mxu0 0.0
        %810 = vmatpush2.msra.mxu0 0.0
        %811 = vmatprep.subr.mxu0 0.0
        %812 = vmatpush2.msra.mxu0 0.0
        %813 = vmatprep.subr.mxu0 0.0
        %814 = vmatpush2.msra.mxu0 0.0
        %815 = vmatprep.subr.mxu0 0.0
        %816 = vmatpush2.msra.mxu0 0.0
        %817 = vmatprep.subr.mxu0 0.0
        %818 = vmatpush2.msra.mxu0 0.0
        %819 = vmatprep.subr.mxu0 0.0
        %820 = vmatpush2.msra.mxu0 0.0
        %821 = vmatprep.subr.mxu0 0.0
        %822 = vmatpush2.msra.mxu0 0.0
        %823 = vmatprep.subr.mxu0 0.0
        %824 = vmatpush2.msra.mxu0 0.0
        %825 = vmatprep.subr.mxu0 0.0
        %826 = vmatpush2.msra.mxu0 0.0
        %827 = vmatprep.subr.mxu0 0.0
        %828 = vmatpush2.msra.mxu0 0.0
        %829 = vmatprep.subr.mxu0 0.0
        %830 = vmatpush2.msra.mxu0 0.0
        %831 = vmatprep.subr.mxu0 0.0
        %832 = vmatpush2.msra.mxu0 0.0
        %833 = vmatprep.mubr.f32.mxu0 0.0
        %834 = vmatmul.mubr.f32.gmra.mxu0 %v764
        %v835 = vpop.f32.mrf.mxu0
        %v836 = vadd.f32 0.0, %v835
        %v837 = vpop.f32.mrf.mxu0
        %838 = vmatprep.mubr.f32.mxu0 0.0
        %839 = vmatmul.mubr.f32.gmra.mxu0 %v767
        %v840 = vpop.f32.mrf.mxu0
        %v841 = vadd.f32 0.0, %v840
        %v842 = vpop.f32.mrf.mxu0
        %843 = vdwg.mxu0
        %v844 = vxor.u32 %v680, 2147483648
        %v845 = vxor.u32 %v685, 2147483648
        %v846 = vmul.f32 %v844, 1.442695
        %v847 = vpow.pop %v846
        %v848 = vmul.f32 %v845, 1.442695
        %v849 = vpow.pop %v848
        %v850 = vadd.f32 %v847, 1.0
        %v851 = vadd.f32 %v849, 1.0
        %v852 = vrcp.pop %v850
        %v853 = vmul.f32 1.0, %v852
        %v854 = vrcp.pop %v851
        %v855 = vmul.f32 1.0, %v854
        %v856 = vmul.f32 %v853, %v836
        %v857 = vmul.f32 %v855, %v841
        %v858 = vrcp.pop %v836
        %v859 = vrcp.pop %v841
        %862 = vrot.lane.b32.xlu0 %v858, 96
        %v863 = vpop.permute.xlu0 %862
        %864 = vrot.lane.b32.xlu0 %v859, 96
        %v865 = vpop.permute.xlu0 %864
        %v868 = vmul.f32 %v856, %v863
        %v869 = vmul.f32 %v857, %v865
        %s870 = scalar_lea.vmem [#allocation14], 32
        %v871 = vld [vmem:[%s870] sm:$0xff]
        %v872 = vld [vmem:[%s870 + $0x8] sm:$0xff]
        %v873 = vld [vmem:[%s870 + $0x10] sm:$0xff]
        %v874 = vld [vmem:[%s870 + $0x18] sm:$0xff]
        %v875 = vsel %vm594, %v692, -inf
        %v876 = vsel %vm594, %v698, -inf
        %v877 = vsel %vm594, %v704, -inf
        %v878 = vsel %vm594, %v710, -inf
        %v879 = vmax.f32 %v875, %v876
        %v880 = vmax.f32 %v877, %v878
        %v881 = vmax.f32 %v879, %v880
        %v882 = vrot.slane %v881, 4
        %v883 = vmax.f32 %v881, %v882
        %v884 = vrot.slane %v883, 2
        %v885 = vmax.f32 %v883, %v884
        %v886 = vrot.slane %v885, 1
        %v887 = vmax.f32 %v885, %v886
        %v888 = vsel %vm594, %v871, -inf
        %889 = vmax.xlane.f32.xlu0 %v888
        %v890 = vpop.xlane.xlu0 %889
        %v891 = vsel %vm594, %v872, -inf
        %892 = vmax.xlane.f32.xlu0 %v891
        %v893 = vpop.xlane.xlu0 %892
        %v894 = vsel %vm594, %v873, -inf
        %895 = vmax.xlane.f32.xlu0 %v894
        %v896 = vpop.xlane.xlu0 %895
        %v897 = vsel %vm594, %v874, -inf
        %898 = vmax.xlane.f32.xlu0 %v897
        %v899 = vpop.xlane.xlu0 %898
        %v900 = vsub.f32 %v692, %v887
        %v901 = vsub.f32 %v698, %v887
        %v902 = vsub.f32 %v704, %v887
        %v903 = vsub.f32 %v710, %v887
        %v904 = vmul.f32 %v900, 1.442695
        %v905 = vpow.pop %v904
        %v906 = vmul.f32 %v901, 1.442695
        %v907 = vpow.pop %v906
        %v908 = vmul.f32 %v902, 1.442695
        %v909 = vpow.pop %v908
        %v910 = vmul.f32 %v903, 1.442695
        %v911 = vpow.pop %v910
        %v912 = vsub.f32 %v871, %v890
        %v913 = vsub.f32 %v872, %v893
        %v914 = vsub.f32 %v873, %v896
        %v915 = vsub.f32 %v874, %v899
        %v916 = vmul.f32 %v912, 1.442695
        %v917 = vpow.pop %v916
        %v918 = vmul.f32 %v913, 1.442695
        %v919 = vpow.pop %v918
        %v920 = vmul.f32 %v914, 1.442695
        %v921 = vpow.pop %v920
        %v922 = vmul.f32 %v915, 1.442695
        %v923 = vpow.pop %v922
        %928 = vrot.lane.b32.xlu0 %v692, 96
        %v929 = vpop.permute.xlu0 %928
        %930 = vrot.lane.b32.xlu0 %v698, 96
        %v931 = vpop.permute.xlu0 %930
        %932 = vrot.lane.b32.xlu0 %v704, 96
        %v933 = vpop.permute.xlu0 %932
        %934 = vrot.lane.b32.xlu0 %v710, 96
        %v935 = vpop.permute.xlu0 %934
        %v940 = vmul.f32 %v905, %v929
        %v941 = vmul.f32 %v907, %v931
        %v942 = vmul.f32 %v909, %v933
        %v943 = vmul.f32 %v911, %v935
        %948 = vrot.lane.b32.xlu0 %v905, 32
        %v949 = vpop.permute.xlu0 %948
        %950 = vrot.lane.b32.xlu0 %v907, 32
        %v951 = vpop.permute.xlu0 %950
        %952 = vrot.lane.b32.xlu0 %v909, 32
        %v953 = vpop.permute.xlu0 %952
        %954 = vrot.lane.b32.xlu0 %v911, 32
        %v955 = vpop.permute.xlu0 %954
        %v960 = vsel %vm594, %v940, %v949
        %v961 = vsel %vm594, %v941, %v951
        %v962 = vsel %vm594, %v942, %v953
        %v963 = vsel %vm594, %v943, %v955
        %v965 = vsel %vm594, %v917, 0
        %v968 = vsel %vm594, %v919, 0
        %v971 = vsel %vm594, %v921, 0
        %v974 = vsel %vm594, %v923, 0
        %976 = vmatprep.subr.mxu0 0.0
        %977 = vmatpush1.msra.mxu0 0.0
        %978 = vmatprep.subr.mxu0 0.0
        %979 = vmatpush1.msra.mxu0 0.0
        %980 = vmatprep.subr.mxu0 0.0
        %981 = vmatpush1.msra.mxu0 0.0
        %982 = vmatprep.subr.mxu0 0.0
        %983 = vmatpush1.msra.mxu0 0.0
        %984 = vmatprep.subr.mxu0 0.0
        %985 = vmatpush1.msra.mxu0 0.0
        %986 = vmatprep.subr.mxu0 0.0
        %987 = vmatpush1.msra.mxu0 0.0
        %988 = vmatprep.subr.mxu0 0.0
        %989 = vmatpush1.msra.mxu0 0.0
        %990 = vmatprep.subr.mxu0 0.0
        %991 = vmatpush1.msra.mxu0 0.0
        %992 = vmatprep.subr.mxu0 0.0
        %993 = vmatpush1.msra.mxu0 0.0
        %994 = vmatprep.subr.mxu0 0.0
        %995 = vmatpush1.msra.mxu0 0.0
        %996 = vmatprep.subr.mxu0 0.0
        %997 = vmatpush1.msra.mxu0 0.0
        %998 = vmatprep.subr.mxu0 0.0
        %999 = vmatpush1.msra.mxu0 0.0
        %1000 = vmatprep.subr.mxu0 0.0
        %1001 = vmatpush1.msra.mxu0 %v963
        %1002 = vmatprep.subr.mxu0 0.0
        %1003 = vmatpush1.msra.mxu0 %v962
        %1004 = vmatprep.subr.mxu0 0.0
        %1005 = vmatpush1.msra.mxu0 %v961
        %1006 = vmatprep.subr.mxu0 0.0
        %1007 = vmatpush1.msra.mxu0 %v960
        %1008 = vmatprep.subr.mxu0 0.0
        %1009 = vmatpush2.msra.mxu0 0.0
        %1010 = vmatprep.subr.mxu0 0.0
        %1011 = vmatpush2.msra.mxu0 0.0
        %1012 = vmatprep.subr.mxu0 0.0
        %1013 = vmatpush2.msra.mxu0 0.0
        %1014 = vmatprep.subr.mxu0 0.0
        %1015 = vmatpush2.msra.mxu0 0.0
        %1016 = vmatprep.subr.mxu0 0.0
        %1017 = vmatpush2.msra.mxu0 0.0
        %1018 = vmatprep.subr.mxu0 0.0
        %1019 = vmatpush2.msra.mxu0 0.0
        %1020 = vmatprep.subr.mxu0 0.0
        %1021 = vmatpush2.msra.mxu0 0.0
        %1022 = vmatprep.subr.mxu0 0.0
        %1023 = vmatpush2.msra.mxu0 0.0
        %1024 = vmatprep.subr.mxu0 0.0
        %1025 = vmatpush2.msra.mxu0 0.0
        %1026 = vmatprep.subr.mxu0 0.0
        %1027 = vmatpush2.msra.mxu0 0.0
        %1028 = vmatprep.subr.mxu0 0.0
        %1029 = vmatpush2.msra.mxu0 0.0
        %1030 = vmatprep.subr.mxu0 0.0
        %1031 = vmatpush2.msra.mxu0 0.0
        %1032 = vmatprep.subr.mxu0 0.0
        %1033 = vmatpush2.msra.mxu0 0.0
        %1034 = vmatprep.subr.mxu0 0.0
        %1035 = vmatpush2.msra.mxu0 0.0
        %1036 = vmatprep.subr.mxu0 0.0
        %1037 = vmatpush2.msra.mxu0 0.0
        %1038 = vmatprep.subr.mxu0 0.0
        %1039 = vmatpush2.msra.mxu0 0.0
        %1040 = vmatprep.mubr.f32.mxu0 0.0
        %1041 = vmatmul.mubr.f32.gmra.mxu0 %v965
        %v1042 = vpop.f32.mrf.mxu0
        %v1043 = vadd.f32 0.0, %v1042
        %v1044 = vpop.f32.mrf.mxu0
        %1045 = vmatprep.mubr.f32.mxu0 0.0
        %1046 = vmatmul.mubr.f32.gmra.mxu0 %v968
        %v1047 = vpop.f32.mrf.mxu0
        %v1048 = vadd.f32 0.0, %v1047
        %v1049 = vpop.f32.mrf.mxu0
        %1050 = vmatprep.mubr.f32.mxu0 0.0
        %1051 = vmatmul.mubr.f32.gmra.mxu0 %v971
        %v1052 = vpop.f32.mrf.mxu0
        %v1053 = vadd.f32 0.0, %v1052
        %v1054 = vpop.f32.mrf.mxu0
        %1055 = vmatprep.mubr.f32.mxu0 0.0
        %1056 = vmatmul.mubr.f32.gmra.mxu0 %v974
        %v1057 = vpop.f32.mrf.mxu0
        %v1058 = vadd.f32 0.0, %v1057
        %v1059 = vpop.f32.mrf.mxu0
        %1060 = vdwg.mxu0
        %v1061 = vxor.u32 %v690, 2147483648
        %v1062 = vxor.u32 %v696, 2147483648
        %v1063 = vxor.u32 %v702, 2147483648
        %v1064 = vxor.u32 %v708, 2147483648
        %v1065 = vmul.f32 %v1061, 1.442695
        %v1066 = vpow.pop %v1065
        %v1067 = vmul.f32 %v1062, 1.442695
        %v1068 = vpow.pop %v1067
        %v1069 = vmul.f32 %v1063, 1.442695
        %v1070 = vpow.pop %v1069
        %v1071 = vmul.f32 %v1064, 1.442695
        %v1072 = vpow.pop %v1071
        %v1073 = vadd.f32 %v1066, 1.0
        %v1074 = vadd.f32 %v1068, 1.0
        %v1075 = vadd.f32 %v1070, 1.0
        %v1076 = vadd.f32 %v1072, 1.0
        %v1077 = vrcp.pop %v1073
        %v1078 = vmul.f32 1.0, %v1077
        %v1079 = vrcp.pop %v1074
        %v1080 = vmul.f32 1.0, %v1079
        %v1081 = vrcp.pop %v1075
        %v1082 = vmul.f32 1.0, %v1081
        %v1083 = vrcp.pop %v1076
        %v1084 = vmul.f32 1.0, %v1083
        %1089 = vrot.lane.b32.xlu0 %v1043, 96
        %v1090 = vpop.permute.xlu0 %1089
        %1091 = vrot.lane.b32.xlu0 %v1048, 96
        %v1092 = vpop.permute.xlu0 %1091
        %1093 = vrot.lane.b32.xlu0 %v1053, 96
        %v1094 = vpop.permute.xlu0 %1093
        %1095 = vrot.lane.b32.xlu0 %v1058, 96
        %v1096 = vpop.permute.xlu0 %1095
        %v1101 = vmul.f32 %v1078, %v1090
        %v1102 = vmul.f32 %v1080, %v1092
        %v1103 = vmul.f32 %v1082, %v1094
        %v1104 = vmul.f32 %v1084, %v1096
        %v1105 = vrcp.pop %v1043
        %v1106 = vrcp.pop %v1048
        %v1107 = vrcp.pop %v1053
        %v1108 = vrcp.pop %v1058
        %1113 = vrot.lane.b32.xlu0 %v1105, 64
        %v1114 = vpop.permute.xlu0 %1113
        %1115 = vrot.lane.b32.xlu0 %v1106, 64
        %v1116 = vpop.permute.xlu0 %1115
        %1117 = vrot.lane.b32.xlu0 %v1107, 64
        %v1118 = vpop.permute.xlu0 %1117
        %1119 = vrot.lane.b32.xlu0 %v1108, 64
        %v1120 = vpop.permute.xlu0 %1119
        %v1125 = vmul.f32 %v1101, %v1114
        %v1126 = vmul.f32 %v1102, %v1116
        %v1127 = vmul.f32 %v1103, %v1118
        %v1128 = vmul.f32 %v1104, %v1120
        %1133 = vrot.lane.b32.xlu0 %v1125, 32
        %v1134 = vpop.permute.xlu0 %1133
        %1135 = vrot.lane.b32.xlu0 %v1126, 32
        %v1136 = vpop.permute.xlu0 %1135
        %1137 = vrot.lane.b32.xlu0 %v1127, 32
        %v1138 = vpop.permute.xlu0 %1137
        %1139 = vrot.lane.b32.xlu0 %v1128, 32
        %v1140 = vpop.permute.xlu0 %1139
        %v1141 = vld [vmem:[#allocation8] sm:$0xff]
        %v1142 = vld [vmem:[#allocation8 + $0x8] sm:$0xff]
        %v1143 = vld [vmem:[#allocation8 + $0x10] sm:$0xff]
        %v1144 = vld [vmem:[#allocation8 + $0x18] sm:$0xff]
        %v1145 = vld [vmem:[%s5] sm:$0x1]
        %v1147 = vlaneseq
        %v1148 = vshrl.u32 %v1147, 7
        %v1149 = vsub.s32 0, %v1148
        %v1150 = vrot.slane %v1145, %v1149
        %v1153 = vsel %vm594, %v868, 0
        %v1156 = vsel %vm594, %v869, 0
        %v1158 = vsel %vm594, %v1134, 0
        %v1160 = vsel %vm594, %v1136, 0
        %v1162 = vsel %vm594, %v1138, 0
        %v1164 = vsel %vm594, %v1140, 0
        %1166 = vmatprep.subr.mxu0 0.0
        %1167 = vmatpush1.msra.mxu0 0.0
        %1168 = vmatprep.subr.mxu0 0.0
        %1169 = vmatpush1.msra.mxu0 0.0
        %1170 = vmatprep.subr.mxu0 0.0
        %1171 = vmatpush1.msra.mxu0 0.0
        %1172 = vmatprep.subr.mxu0 0.0
        %1173 = vmatpush1.msra.mxu0 0.0
        %1174 = vmatprep.subr.mxu0 0.0
        %1175 = vmatpush1.msra.mxu0 0.0
        %1176 = vmatprep.subr.mxu0 0.0
        %1177 = vmatpush1.msra.mxu0 0.0
        %1178 = vmatprep.subr.mxu0 0.0
        %1179 = vmatpush1.msra.mxu0 0.0
        %1180 = vmatprep.subr.mxu0 0.0
        %1181 = vmatpush1.msra.mxu0 0.0
        %1182 = vmatprep.subr.mxu0 0.0
        %1183 = vmatpush1.msra.mxu0 0.0
        %1184 = vmatprep.subr.mxu0 0.0
        %1185 = vmatpush1.msra.mxu0 0.0
        %1186 = vmatprep.subr.mxu0 0.0
        %1187 = vmatpush1.msra.mxu0 0.0
        %1188 = vmatprep.subr.mxu0 0.0
        %1189 = vmatpush1.msra.mxu0 0.0
        %1190 = vmatprep.subr.mxu0 0.0
        %1191 = vmatpush1.msra.mxu0 %v1144
        %1192 = vmatprep.subr.mxu0 0.0
        %1193 = vmatpush1.msra.mxu0 %v1143
        %1194 = vmatprep.subr.mxu0 0.0
        %1195 = vmatpush1.msra.mxu0 %v1142
        %1196 = vmatprep.subr.mxu0 0.0
        %1197 = vmatpush1.msra.mxu0 %v1141
        %1198 = vmatprep.subr.mxu0 0.0
        %1199 = vmatpush2.msra.mxu0 0.0
        %1200 = vmatprep.subr.mxu0 0.0
        %1201 = vmatpush2.msra.mxu0 0.0
        %1202 = vmatprep.subr.mxu0 0.0
        %1203 = vmatpush2.msra.mxu0 0.0
        %1204 = vmatprep.subr.mxu0 0.0
        %1205 = vmatpush2.msra.mxu0 0.0
        %1206 = vmatprep.subr.mxu0 0.0
        %1207 = vmatpush2.msra.mxu0 0.0
        %1208 = vmatprep.subr.mxu0 0.0
        %1209 = vmatpush2.msra.mxu0 0.0
        %1210 = vmatprep.subr.mxu0 0.0
        %1211 = vmatpush2.msra.mxu0 0.0
        %1212 = vmatprep.subr.mxu0 0.0
        %1213 = vmatpush2.msra.mxu0 0.0
        %1214 = vmatprep.subr.mxu0 0.0
        %1215 = vmatpush2.msra.mxu0 0.0
        %1216 = vmatprep.subr.mxu0 0.0
        %1217 = vmatpush2.msra.mxu0 0.0
        %1218 = vmatprep.subr.mxu0 0.0
        %1219 = vmatpush2.msra.mxu0 0.0
        %1220 = vmatprep.subr.mxu0 0.0
        %1221 = vmatpush2.msra.mxu0 0.0
        %1222 = vmatprep.subr.mxu0 0.0
        %1223 = vmatpush2.msra.mxu0 0.0
        %1224 = vmatprep.subr.mxu0 0.0
        %1225 = vmatpush2.msra.mxu0 0.0
        %1226 = vmatprep.subr.mxu0 0.0
        %1227 = vmatpush2.msra.mxu0 0.0
        %1228 = vmatprep.subr.mxu0 0.0
        %1229 = vmatpush2.msra.mxu0 0.0
        %1230 = vmatprep.mubr.f32.mxu0 0.0
        %1231 = vmatmul.mubr.f32.gmra.mxu0 %v1153
        %v1232 = vpop.f32.mrf.mxu0
        %v1233 = vadd.f32 %v1150, %v1232
        %v1234 = vpop.f32.mrf.mxu0
        %1235 = vmatprep.mubr.f32.mxu0 0.0
        %1236 = vmatmul.mubr.f32.gmra.mxu0 %v1156
        %v1237 = vpop.f32.mrf.mxu0
        %v1238 = vadd.f32 %v1150, %v1237
        %v1239 = vpop.f32.mrf.mxu0
        %1240 = vmatprep.mubr.f32.mxu0 0.0
        %1241 = vmatmul.mubr.f32.gmra.mxu0 %v1158
        %v1242 = vpop.f32.mrf.mxu0
        %v1243 = vadd.f32 %v1150, %v1242
        %v1244 = vpop.f32.mrf.mxu0
        %1245 = vmatprep.mubr.f32.mxu0 0.0
        %1246 = vmatmul.mubr.f32.gmra.mxu0 %v1160
        %v1247 = vpop.f32.mrf.mxu0
        %v1248 = vadd.f32 %v1150, %v1247
        %v1249 = vpop.f32.mrf.mxu0
        %1250 = vmatprep.mubr.f32.mxu0 0.0
        %1251 = vmatmul.mubr.f32.gmra.mxu0 %v1162
        %v1252 = vpop.f32.mrf.mxu0
        %v1253 = vadd.f32 %v1150, %v1252
        %v1254 = vpop.f32.mrf.mxu0
        %1255 = vmatprep.mubr.f32.mxu0 0.0
        %1256 = vmatmul.mubr.f32.gmra.mxu0 %v1164
        %v1257 = vpop.f32.mrf.mxu0
        %v1258 = vadd.f32 %v1150, %v1257
        %v1259 = vpop.f32.mrf.mxu0
        %1260 = vdwg.mxu0
        %1265 = vrot.lane.b32.xlu0 %v1243, 96
        %v1266 = vpop.permute.xlu0 %1265
        %1267 = vrot.lane.b32.xlu0 %v1248, 96
        %v1268 = vpop.permute.xlu0 %1267
        %1269 = vrot.lane.b32.xlu0 %v1253, 96
        %v1270 = vpop.permute.xlu0 %1269
        %1271 = vrot.lane.b32.xlu0 %v1258, 96
        %v1272 = vpop.permute.xlu0 %1271
        %v1273 = vld [vmem:[#allocation10] sm:$0xff]
        %v1274 = vld [vmem:[#allocation10 + $0x8] sm:$0xff]
        %v1275 = vld [vmem:[#allocation10 + $0x10] sm:$0xff]
        %v1276 = vld [vmem:[#allocation10 + $0x18] sm:$0xff]
        %v1277 = vld [vmem:[#allocation10 + $0x20] sm:$0xff]
        %v1278 = vld [vmem:[#allocation10 + $0x28] sm:$0xff]
        %v1279 = vld [vmem:[#allocation10 + $0x30] sm:$0xff]
        %v1280 = vld [vmem:[#allocation10 + $0x38] sm:$0xff]
        %v1281 = vld [vmem:[#allocation11] sm:$0x3]
        %v1283 = vlaneseq
        %v1284 = vshrl.u32 %v1283, 7
        %v1285 = vsub.s32 0, %v1284
        %v1286 = vrot.slane %v1281, %v1285
        %v1287 = vlaneseq
        %v1288 = vshrl.u32 %v1287, 7
        %v1289 = vsub.s32 1, %v1288
        %v1290 = vrot.slane %v1281, %v1289
        %v1294 = vsel %vm594, %v1233, 0
        %v1297 = vsel %vm594, %v1238, 0
        %v1299 = vsel %vm594, %v1266, 0
        %v1301 = vsel %vm594, %v1268, 0
        %v1303 = vsel %vm594, %v1270, 0
        %v1305 = vsel %vm594, %v1272, 0
        %1307 = vmatprep.subr.mxu0 0.0
        %1308 = vmatpush1.msra.mxu0 0.0
        %1309 = vmatprep.subr.mxu0 0.0
        %1310 = vmatpush1.msra.mxu0 0.0
        %1311 = vmatprep.subr.mxu0 0.0
        %1312 = vmatpush1.msra.mxu0 0.0
        %1313 = vmatprep.subr.mxu0 0.0
        %1314 = vmatpush1.msra.mxu0 0.0
        %1315 = vmatprep.subr.mxu0 0.0
        %1316 = vmatpush1.msra.mxu0 0.0
        %1317 = vmatprep.subr.mxu0 0.0
        %1318 = vmatpush1.msra.mxu0 0.0
        %1319 = vmatprep.subr.mxu0 0.0
        %1320 = vmatpush1.msra.mxu0 0.0
        %1321 = vmatprep.subr.mxu0 0.0
        %1322 = vmatpush1.msra.mxu0 0.0
        %1323 = vmatprep.subr.mxu0 0.0
        %1324 = vmatpush1.msra.mxu0 0.0
        %1325 = vmatprep.subr.mxu0 0.0
        %1326 = vmatpush1.msra.mxu0 0.0
        %1327 = vmatprep.subr.mxu0 0.0
        %1328 = vmatpush1.msra.mxu0 0.0
        %1329 = vmatprep.subr.mxu0 0.0
        %1330 = vmatpush1.msra.mxu0 0.0
        %1331 = vmatprep.subr.mxu0 %v1280
        %1332 = vmatpush1.msra.mxu0 %v1279
        %1333 = vmatprep.subr.mxu0 %v1278
        %1334 = vmatpush1.msra.mxu0 %v1277
        %1335 = vmatprep.subr.mxu0 %v1276
        %1336 = vmatpush1.msra.mxu0 %v1275
        %1337 = vmatprep.subr.mxu0 %v1274
        %1338 = vmatpush1.msra.mxu0 %v1273
        %1339 = vmatprep.subr.mxu0 0.0
        %1340 = vmatpush2.msra.mxu0 0.0
        %1341 = vmatprep.subr.mxu0 0.0
        %1342 = vmatpush2.msra.mxu0 0.0
        %1343 = vmatprep.subr.mxu0 0.0
        %1344 = vmatpush2.msra.mxu0 0.0
        %1345 = vmatprep.subr.mxu0 0.0
        %1346 = vmatpush2.msra.mxu0 0.0
        %1347 = vmatprep.subr.mxu0 0.0
        %1348 = vmatpush2.msra.mxu0 0.0
        %1349 = vmatprep.subr.mxu0 0.0
        %1350 = vmatpush2.msra.mxu0 0.0
        %1351 = vmatprep.subr.mxu0 0.0
        %1352 = vmatpush2.msra.mxu0 0.0
        %1353 = vmatprep.subr.mxu0 0.0
        %1354 = vmatpush2.msra.mxu0 0.0
        %1355 = vmatprep.subr.mxu0 0.0
        %1356 = vmatpush2.msra.mxu0 0.0
        %1357 = vmatprep.subr.mxu0 0.0
        %1358 = vmatpush2.msra.mxu0 0.0
        %1359 = vmatprep.subr.mxu0 0.0
        %1360 = vmatpush2.msra.mxu0 0.0
        %1361 = vmatprep.subr.mxu0 0.0
        %1362 = vmatpush2.msra.mxu0 0.0
        %1363 = vmatprep.subr.mxu0 0.0
        %1364 = vmatpush2.msra.mxu0 0.0
        %1365 = vmatprep.subr.mxu0 0.0
        %1366 = vmatpush2.msra.mxu0 0.0
        %1367 = vmatprep.subr.mxu0 0.0
        %1368 = vmatpush2.msra.mxu0 0.0
        %1369 = vmatprep.subr.mxu0 0.0
        %1370 = vmatpush2.msra.mxu0 0.0
        %1371 = vmatprep.mubr.f32.mxu0 0.0
        %1372 = vmatmul.mubr.f32.gmra.mxu0 %v1294
        %v1373 = vpop.f32.mrf.mxu0
        %v1374 = vadd.f32 %v1286, %v1373
        %v1375 = vpop.f32.mrf.mxu0
        %v1376 = vadd.f32 %v1290, %v1375
        %1377 = vmatprep.mubr.f32.mxu0 0.0
        %1378 = vmatmul.mubr.f32.gmra.mxu0 %v1297
        %v1379 = vpop.f32.mrf.mxu0
        %v1380 = vadd.f32 %v1286, %v1379
        %v1381 = vpop.f32.mrf.mxu0
        %v1382 = vadd.f32 %v1290, %v1381
        %1383 = vmatprep.mubr.f32.mxu0 0.0
        %1384 = vmatmul.mubr.f32.gmra.mxu0 %v1299
        %v1385 = vpop.f32.mrf.mxu0
        %v1386 = vadd.f32 %v1286, %v1385
        %v1387 = vpop.f32.mrf.mxu0
        %1388 = vmatprep.mubr.f32.mxu0 0.0
        %1389 = vmatmul.mubr.f32.gmra.mxu0 %v1301
        %v1390 = vpop.f32.mrf.mxu0
        %v1391 = vadd.f32 %v1286, %v1390
        %v1392 = vpop.f32.mrf.mxu0
        %1393 = vmatprep.mubr.f32.mxu0 0.0
        %1394 = vmatmul.mubr.f32.gmra.mxu0 %v1303
        %v1395 = vpop.f32.mrf.mxu0
        %v1396 = vadd.f32 %v1286, %v1395
        %v1397 = vpop.f32.mrf.mxu0
        %1398 = vmatprep.mubr.f32.mxu0 0.0
        %1399 = vmatmul.mubr.f32.gmra.mxu0 %v1305
        %v1400 = vpop.f32.mrf.mxu0
        %v1401 = vadd.f32 %v1286, %v1400
        %v1402 = vpop.f32.mrf.mxu0
        %1403 = vdwg.mxu0
        %s1404 = scalar_lea.vmem [#allocation14], 64
        %v1405 = vld [vmem:[%s1404] sm:$0xff]
        %v1406 = vld [vmem:[%s1404 + $0x8] sm:$0xff]
        %v1407 = vsel %vm714, %v1386, -inf
        %v1408 = vsel %vm714, %v1391, -inf
        %v1409 = vsel %vm714, %v1396, -inf
        %v1410 = vsel %vm714, %v1401, -inf
        %v1411 = vmax.f32 %v1407, %v1408
        %v1412 = vmax.f32 %v1409, %v1410
        %v1413 = vmax.f32 %v1411, %v1412
        %v1414 = vrot.slane %v1413, 4
        %v1415 = vmax.f32 %v1413, %v1414
        %v1416 = vrot.slane %v1415, 2
        %v1417 = vmax.f32 %v1415, %v1416
        %v1418 = vrot.slane %v1417, 1
        %v1419 = vmax.f32 %v1417, %v1418
        %v1420 = vsel %vm594, %v1405, -inf
        %1421 = vmax.xlane.f32.xlu0 %v1420
        %v1422 = vpop.xlane.xlu0 %1421
        %v1423 = vsel %vm594, %v1406, -inf
        %1424 = vmax.xlane.f32.xlu0 %v1423
        %v1425 = vpop.xlane.xlu0 %1424
        %v1426 = vsub.f32 %v1386, %v1419
        %v1427 = vsub.f32 %v1391, %v1419
        %v1428 = vsub.f32 %v1396, %v1419
        %v1429 = vsub.f32 %v1401, %v1419
        %v1430 = vmul.f32 %v1426, 1.442695
        %v1431 = vpow.pop %v1430
        %v1432 = vmul.f32 %v1427, 1.442695
        %v1433 = vpow.pop %v1432
        %v1434 = vmul.f32 %v1428, 1.442695
        %v1435 = vpow.pop %v1434
        %v1436 = vmul.f32 %v1429, 1.442695
        %v1437 = vpow.pop %v1436
        %v1438 = vsub.f32 %v1405, %v1422
        %v1439 = vsub.f32 %v1406, %v1425
        %v1440 = vmul.f32 %v1438, 1.442695
        %v1441 = vpow.pop %v1440
        %v1442 = vmul.f32 %v1439, 1.442695
        %v1443 = vpow.pop %v1442
        %1448 = vrot.lane.b32.xlu0 %v1386, 96
        %v1449 = vpop.permute.xlu0 %1448
        %1450 = vrot.lane.b32.xlu0 %v1391, 96
        %v1451 = vpop.permute.xlu0 %1450
        %1452 = vrot.lane.b32.xlu0 %v1396, 96
        %v1453 = vpop.permute.xlu0 %1452
        %1454 = vrot.lane.b32.xlu0 %v1401, 96
        %v1455 = vpop.permute.xlu0 %1454
        %v1460 = vmul.f32 %v1431, %v1449
        %v1461 = vmul.f32 %v1433, %v1451
        %v1462 = vmul.f32 %v1435, %v1453
        %v1463 = vmul.f32 %v1437, %v1455
        %1468 = vrot.lane.b32.xlu0 %v1460, 96
        %v1469 = vpop.permute.xlu0 %1468
        %1470 = vrot.lane.b32.xlu0 %v1461, 96
        %v1471 = vpop.permute.xlu0 %1470
        %1472 = vrot.lane.b32.xlu0 %v1462, 96
        %v1473 = vpop.permute.xlu0 %1472
        %1474 = vrot.lane.b32.xlu0 %v1463, 96
        %v1475 = vpop.permute.xlu0 %1474
        %v1480 = vsel %vm594, %v1469, %v1431
        %v1481 = vsel %vm594, %v1471, %v1433
        %v1482 = vsel %vm594, %v1473, %v1435
        %v1483 = vsel %vm594, %v1475, %v1437
        %v1485 = vsel %vm594, %v1441, 0
        %v1488 = vsel %vm594, %v1443, 0
        %1490 = vmatprep.subr.mxu0 0.0
        %1491 = vmatpush1.msra.mxu0 0.0
        %1492 = vmatprep.subr.mxu0 0.0
        %1493 = vmatpush1.msra.mxu0 0.0
        %1494 = vmatprep.subr.mxu0 0.0
        %1495 = vmatpush1.msra.mxu0 0.0
        %1496 = vmatprep.subr.mxu0 0.0
        %1497 = vmatpush1.msra.mxu0 0.0
        %1498 = vmatprep.subr.mxu0 0.0
        %1499 = vmatpush1.msra.mxu0 0.0
        %1500 = vmatprep.subr.mxu0 0.0
        %1501 = vmatpush1.msra.mxu0 0.0
        %1502 = vmatprep.subr.mxu0 0.0
        %1503 = vmatpush1.msra.mxu0 0.0
        %1504 = vmatprep.subr.mxu0 0.0
        %1505 = vmatpush1.msra.mxu0 0.0
        %1506 = vmatprep.subr.mxu0 0.0
        %1507 = vmatpush1.msra.mxu0 0.0
        %1508 = vmatprep.subr.mxu0 0.0
        %1509 = vmatpush1.msra.mxu0 0.0
        %1510 = vmatprep.subr.mxu0 0.0
        %1511 = vmatpush1.msra.mxu0 0.0
        %1512 = vmatprep.subr.mxu0 0.0
        %1513 = vmatpush1.msra.mxu0 0.0
        %1514 = vmatprep.subr.mxu0 0.0
        %1515 = vmatpush1.msra.mxu0 %v1483
        %1516 = vmatprep.subr.mxu0 0.0
        %1517 = vmatpush1.msra.mxu0 %v1482
        %1518 = vmatprep.subr.mxu0 0.0
        %1519 = vmatpush1.msra.mxu0 %v1481
        %1520 = vmatprep.subr.mxu0 0.0
        %1521 = vmatpush1.msra.mxu0 %v1480
        %1522 = vmatprep.subr.mxu0 0.0
        %1523 = vmatpush2.msra.mxu0 0.0
        %1524 = vmatprep.subr.mxu0 0.0
        %1525 = vmatpush2.msra.mxu0 0.0
        %1526 = vmatprep.subr.mxu0 0.0
        %1527 = vmatpush2.msra.mxu0 0.0
        %1528 = vmatprep.subr.mxu0 0.0
        %1529 = vmatpush2.msra.mxu0 0.0
        %1530 = vmatprep.subr.mxu0 0.0
        %1531 = vmatpush2.msra.mxu0 0.0
        %1532 = vmatprep.subr.mxu0 0.0
        %1533 = vmatpush2.msra.mxu0 0.0
        %1534 = vmatprep.subr.mxu0 0.0
        %1535 = vmatpush2.msra.mxu0 0.0
        %1536 = vmatprep.subr.mxu0 0.0
        %1537 = vmatpush2.msra.mxu0 0.0
        %1538 = vmatprep.subr.mxu0 0.0
        %1539 = vmatpush2.msra.mxu0 0.0
        %1540 = vmatprep.subr.mxu0 0.0
        %1541 = vmatpush2.msra.mxu0 0.0
        %1542 = vmatprep.subr.mxu0 0.0
        %1543 = vmatpush2.msra.mxu0 0.0
        %1544 = vmatprep.subr.mxu0 0.0
        %1545 = vmatpush2.msra.mxu0 0.0
        %1546 = vmatprep.subr.mxu0 0.0
        %1547 = vmatpush2.msra.mxu0 0.0
        %1548 = vmatprep.subr.mxu0 0.0
        %1549 = vmatpush2.msra.mxu0 0.0
        %1550 = vmatprep.subr.mxu0 0.0
        %1551 = vmatpush2.msra.mxu0 0.0
        %1552 = vmatprep.subr.mxu0 0.0
        %1553 = vmatpush2.msra.mxu0 0.0
        %1554 = vmatprep.mubr.f32.mxu0 0.0
        %1555 = vmatmul.mubr.f32.gmra.mxu0 %v1485
        %v1556 = vpop.f32.mrf.mxu0
        %v1557 = vadd.f32 0.0, %v1556
        %v1558 = vpop.f32.mrf.mxu0
        %1559 = vmatprep.mubr.f32.mxu0 0.0
        %1560 = vmatmul.mubr.f32.gmra.mxu0 %v1488
        %v1561 = vpop.f32.mrf.mxu0
        %v1562 = vadd.f32 0.0, %v1561
        %v1563 = vpop.f32.mrf.mxu0
        %1564 = vdwg.mxu0
        %v1565 = vxor.u32 %v1374, 2147483648
        %v1566 = vxor.u32 %v1380, 2147483648
        %v1567 = vmul.f32 %v1565, 1.442695
        %v1568 = vpow.pop %v1567
        %v1569 = vmul.f32 %v1566, 1.442695
        %v1570 = vpow.pop %v1569
        %v1571 = vadd.f32 %v1568, 1.0
        %v1572 = vadd.f32 %v1570, 1.0
        %v1573 = vrcp.pop %v1571
        %v1574 = vmul.f32 1.0, %v1573
        %v1575 = vrcp.pop %v1572
        %v1576 = vmul.f32 1.0, %v1575
        %v1577 = vmul.f32 %v1574, %v1557
        %v1578 = vmul.f32 %v1576, %v1562
        %v1579 = vrcp.pop %v1557
        %v1580 = vrcp.pop %v1562
        %1583 = vrot.lane.b32.xlu0 %v1579, 96
        %v1584 = vpop.permute.xlu0 %1583
        %1585 = vrot.lane.b32.xlu0 %v1580, 96
        %v1586 = vpop.permute.xlu0 %1585
        %v1589 = vmul.f32 %v1577, %v1584
        %v1590 = vmul.f32 %v1578, %v1586
        %s1591 = scalar_lea.vmem [#allocation14], 96
        %v1592 = vld [vmem:[%s1591] sm:$0xff]
        %v1593 = vld [vmem:[%s1591 + $0x8] sm:$0xff]
        %v1594 = vld [vmem:[%s1591 + $0x10] sm:$0xff]
        %v1595 = vld [vmem:[%s1591 + $0x18] sm:$0xff]
        %v1596 = vsel %vm594, %v1376, -inf
        %v1597 = vsel %vm594, %v1382, -inf
        %v1598 = vmax.f32 %v1596, %v1597
        %v1599 = vrot.slane %v1598, 4
        %v1600 = vmax.f32 %v1598, %v1599
        %v1601 = vrot.slane %v1600, 2
        %v1602 = vmax.f32 %v1600, %v1601
        %v1603 = vrot.slane %v1602, 1
        %v1604 = vmax.f32 %v1602, %v1603
        %v1605 = vsel %vm724, %v1592, -inf
        %1606 = vmax.xlane.f32.xlu0 %v1605
        %v1607 = vpop.xlane.xlu0 %1606
        %v1608 = vsel %vm724, %v1593, -inf
        %1609 = vmax.xlane.f32.xlu0 %v1608
        %v1610 = vpop.xlane.xlu0 %1609
        %v1611 = vsel %vm724, %v1594, -inf
        %1612 = vmax.xlane.f32.xlu0 %v1611
        %v1613 = vpop.xlane.xlu0 %1612
        %v1614 = vsel %vm724, %v1595, -inf
        %1615 = vmax.xlane.f32.xlu0 %v1614
        %v1616 = vpop.xlane.xlu0 %1615
        %v1617 = vsub.f32 %v1376, %v1604
        %v1618 = vsub.f32 %v1382, %v1604
        %v1619 = vmul.f32 %v1617, 1.442695
        %v1620 = vpow.pop %v1619
        %v1621 = vmul.f32 %v1618, 1.442695
        %v1622 = vpow.pop %v1621
        %v1623 = vsub.f32 %v1592, %v1607
        %v1624 = vsub.f32 %v1593, %v1610
        %v1625 = vsub.f32 %v1594, %v1613
        %v1626 = vsub.f32 %v1595, %v1616
        %v1627 = vmul.f32 %v1623, 1.442695
        %v1628 = vpow.pop %v1627
        %v1629 = vmul.f32 %v1624, 1.442695
        %v1630 = vpow.pop %v1629
        %v1631 = vmul.f32 %v1625, 1.442695
        %v1632 = vpow.pop %v1631
        %v1633 = vmul.f32 %v1626, 1.442695
        %v1634 = vpow.pop %v1633
        %1637 = vrot.lane.b32.xlu0 %v1376, 96
        %v1638 = vpop.permute.xlu0 %1637
        %1639 = vrot.lane.b32.xlu0 %v1382, 96
        %v1640 = vpop.permute.xlu0 %1639
        %v1643 = vmul.f32 %v1620, %v1638
        %v1644 = vmul.f32 %v1622, %v1640
        %1647 = vrot.lane.b32.xlu0 %v1620, 32
        %v1648 = vpop.permute.xlu0 %1647
        %1649 = vrot.lane.b32.xlu0 %v1622, 32
        %v1650 = vpop.permute.xlu0 %1649
        %v1653 = vsel %vm594, %v1643, %v1648
        %v1654 = vsel %vm594, %v1644, %v1650
        %v1656 = vsel %vm724, %v1628, 0
        %v1659 = vsel %vm724, %v1630, 0
        %v1662 = vsel %vm724, %v1632, 0
        %v1665 = vsel %vm724, %v1634, 0
        %1667 = vmatprep.subr.mxu0 0.0
        %1668 = vmatpush1.msra.mxu0 0.0
        %1669 = vmatprep.subr.mxu0 0.0
        %1670 = vmatpush1.msra.mxu0 0.0
        %1671 = vmatprep.subr.mxu0 0.0
        %1672 = vmatpush1.msra.mxu0 0.0
        %1673 = vmatprep.subr.mxu0 0.0
        %1674 = vmatpush1.msra.mxu0 0.0
        %1675 = vmatprep.subr.mxu0 0.0
        %1676 = vmatpush1.msra.mxu0 0.0
        %1677 = vmatprep.subr.mxu0 0.0
        %1678 = vmatpush1.msra.mxu0 0.0
        %1679 = vmatprep.subr.mxu0 0.0
        %1680 = vmatpush1.msra.mxu0 0.0
        %1681 = vmatprep.subr.mxu0 0.0
        %1682 = vmatpush1.msra.mxu0 0.0
        %1683 = vmatprep.subr.mxu0 0.0
        %1684 = vmatpush1.msra.mxu0 0.0
        %1685 = vmatprep.subr.mxu0 0.0
        %1686 = vmatpush1.msra.mxu0 0.0
        %1687 = vmatprep.subr.mxu0 0.0
        %1688 = vmatpush1.msra.mxu0 0.0
        %1689 = vmatprep.subr.mxu0 0.0
        %1690 = vmatpush1.msra.mxu0 0.0
        %1691 = vmatprep.subr.mxu0 0.0
        %1692 = vmatpush1.msra.mxu0 0.0
        %1693 = vmatprep.subr.mxu0 0.0
        %1694 = vmatpush1.msra.mxu0 0.0
        %1695 = vmatprep.subr.mxu0 0.0
        %1696 = vmatpush1.msra.mxu0 %v1654
        %1697 = vmatprep.subr.mxu0 0.0
        %1698 = vmatpush1.msra.mxu0 %v1653
        %1699 = vmatprep.subr.mxu0 0.0
        %1700 = vmatpush2.msra.mxu0 0.0
        %1701 = vmatprep.subr.mxu0 0.0
        %1702 = vmatpush2.msra.mxu0 0.0
        %1703 = vmatprep.subr.mxu0 0.0
        %1704 = vmatpush2.msra.mxu0 0.0
        %1705 = vmatprep.subr.mxu0 0.0
        %1706 = vmatpush2.msra.mxu0 0.0
        %1707 = vmatprep.subr.mxu0 0.0
        %1708 = vmatpush2.msra.mxu0 0.0
        %1709 = vmatprep.subr.mxu0 0.0
        %1710 = vmatpush2.msra.mxu0 0.0
        %1711 = vmatprep.subr.mxu0 0.0
        %1712 = vmatpush2.msra.mxu0 0.0
        %1713 = vmatprep.subr.mxu0 0.0
        %1714 = vmatpush2.msra.mxu0 0.0
        %1715 = vmatprep.subr.mxu0 0.0
        %1716 = vmatpush2.msra.mxu0 0.0
        %1717 = vmatprep.subr.mxu0 0.0
        %1718 = vmatpush2.msra.mxu0 0.0
        %1719 = vmatprep.subr.mxu0 0.0
        %1720 = vmatpush2.msra.mxu0 0.0
        %1721 = vmatprep.subr.mxu0 0.0
        %1722 = vmatpush2.msra.mxu0 0.0
        %1723 = vmatprep.subr.mxu0 0.0
        %1724 = vmatpush2.msra.mxu0 0.0
        %1725 = vmatprep.subr.mxu0 0.0
        %1726 = vmatpush2.msra.mxu0 0.0
        %1727 = vmatprep.subr.mxu0 0.0
        %1728 = vmatpush2.msra.mxu0 0.0
        %1729 = vmatprep.subr.mxu0 0.0
        %1730 = vmatpush2.msra.mxu0 0.0
        %1731 = vmatprep.mubr.f32.mxu0 0.0
        %1732 = vmatmul.mubr.f32.gmra.mxu0 %v1656
        %v1733 = vpop.f32.mrf.mxu0
        %v1734 = vadd.f32 0.0, %v1733
        %v1735 = vpop.f32.mrf.mxu0
        %1736 = vmatprep.mubr.f32.mxu0 0.0
        %1737 = vmatmul.mubr.f32.gmra.mxu0 %v1659
        %v1738 = vpop.f32.mrf.mxu0
        %v1739 = vadd.f32 0.0, %v1738
        %v1740 = vpop.f32.mrf.mxu0
        %1741 = vmatprep.mubr.f32.mxu0 0.0
        %1742 = vmatmul.mubr.f32.gmra.mxu0 %v1662
        %v1743 = vpop.f32.mrf.mxu0
        %v1744 = vadd.f32 0.0, %v1743
        %v1745 = vpop.f32.mrf.mxu0
        %1746 = vmatprep.mubr.f32.mxu0 0.0
        %1747 = vmatmul.mubr.f32.gmra.mxu0 %v1665
        %v1748 = vpop.f32.mrf.mxu0
        %v1749 = vadd.f32 0.0, %v1748
        %v1750 = vpop.f32.mrf.mxu0
        %1751 = vdwg.mxu0
        %v1752 = vxor.u32 %v1386, 2147483648
        %v1753 = vxor.u32 %v1391, 2147483648
        %v1754 = vxor.u32 %v1396, 2147483648
        %v1755 = vxor.u32 %v1401, 2147483648
        %v1756 = vmul.f32 %v1752, 1.442695
        %v1757 = vpow.pop %v1756
        %v1758 = vmul.f32 %v1753, 1.442695
        %v1759 = vpow.pop %v1758
        %v1760 = vmul.f32 %v1754, 1.442695
        %v1761 = vpow.pop %v1760
        %v1762 = vmul.f32 %v1755, 1.442695
        %v1763 = vpow.pop %v1762
        %v1764 = vadd.f32 %v1757, 1.0
        %v1765 = vadd.f32 %v1759, 1.0
        %v1766 = vadd.f32 %v1761, 1.0
        %v1767 = vadd.f32 %v1763, 1.0
        %v1768 = vrcp.pop %v1764
        %v1769 = vmul.f32 1.0, %v1768
        %v1770 = vrcp.pop %v1765
        %v1771 = vmul.f32 1.0, %v1770
        %v1772 = vrcp.pop %v1766
        %v1773 = vmul.f32 1.0, %v1772
        %v1774 = vrcp.pop %v1767
        %v1775 = vmul.f32 1.0, %v1774
        %1780 = vrot.lane.b32.xlu0 %v1734, 96
        %v1781 = vpop.permute.xlu0 %1780
        %1782 = vrot.lane.b32.xlu0 %v1739, 96
        %v1783 = vpop.permute.xlu0 %1782
        %1784 = vrot.lane.b32.xlu0 %v1744, 96
        %v1785 = vpop.permute.xlu0 %1784
        %1786 = vrot.lane.b32.xlu0 %v1749, 96
        %v1787 = vpop.permute.xlu0 %1786
        %v1792 = vmul.f32 %v1769, %v1781
        %v1793 = vmul.f32 %v1771, %v1783
        %v1794 = vmul.f32 %v1773, %v1785
        %v1795 = vmul.f32 %v1775, %v1787
        %v1796 = vrcp.pop %v1734
        %v1797 = vrcp.pop %v1739
        %v1798 = vrcp.pop %v1744
        %v1799 = vrcp.pop %v1749
        %1804 = vrot.lane.b32.xlu0 %v1796, 64
        %v1805 = vpop.permute.xlu0 %1804
        %1806 = vrot.lane.b32.xlu0 %v1797, 64
        %v1807 = vpop.permute.xlu0 %1806
        %1808 = vrot.lane.b32.xlu0 %v1798, 64
        %v1809 = vpop.permute.xlu0 %1808
        %1810 = vrot.lane.b32.xlu0 %v1799, 64
        %v1811 = vpop.permute.xlu0 %1810
        %v1816 = vmul.f32 %v1792, %v1805
        %v1817 = vmul.f32 %v1793, %v1807
        %v1818 = vmul.f32 %v1794, %v1809
        %v1819 = vmul.f32 %v1795, %v1811
        %1824 = vrot.lane.b32.xlu0 %v1816, 32
        %v1825 = vpop.permute.xlu0 %1824
        %1826 = vrot.lane.b32.xlu0 %v1817, 32
        %v1827 = vpop.permute.xlu0 %1826
        %1828 = vrot.lane.b32.xlu0 %v1818, 32
        %v1829 = vpop.permute.xlu0 %1828
        %1830 = vrot.lane.b32.xlu0 %v1819, 32
        %v1831 = vpop.permute.xlu0 %1830
        %v1832 = vld [vmem:[#allocation13] sm:$0xff]
        %v1833 = vld [vmem:[#allocation13 + $0x8] sm:$0xff]
        %v1834 = vld [vmem:[#allocation13 + $0x10] sm:$0xff]
        %v1835 = vld [vmem:[#allocation13 + $0x18] sm:$0xff]
        %v1836 = vld [vmem:[%s9] sm:$0x1]
        %v1838 = vlaneseq
        %v1839 = vshrl.u32 %v1838, 7
        %v1840 = vsub.s32 0, %v1839
        %v1841 = vrot.slane %v1836, %v1840
        %v1844 = vsel %vm594, %v1589, 0
        %v1847 = vsel %vm594, %v1590, 0
        %v1849 = vsel %vm594, %v1825, 0
        %v1851 = vsel %vm594, %v1827, 0
        %v1853 = vsel %vm594, %v1829, 0
        %v1855 = vsel %vm594, %v1831, 0
        %1857 = vmatprep.subr.mxu0 0.0
        %1858 = vmatpush1.msra.mxu0 0.0
        %1859 = vmatprep.subr.mxu0 0.0
        %1860 = vmatpush1.msra.mxu0 0.0
        %1861 = vmatprep.subr.mxu0 0.0
        %1862 = vmatpush1.msra.mxu0 0.0
        %1863 = vmatprep.subr.mxu0 0.0
        %1864 = vmatpush1.msra.mxu0 0.0
        %1865 = vmatprep.subr.mxu0 0.0
        %1866 = vmatpush1.msra.mxu0 0.0
        %1867 = vmatprep.subr.mxu0 0.0
        %1868 = vmatpush1.msra.mxu0 0.0
        %1869 = vmatprep.subr.mxu0 0.0
        %1870 = vmatpush1.msra.mxu0 0.0
        %1871 = vmatprep.subr.mxu0 0.0
        %1872 = vmatpush1.msra.mxu0 0.0
        %1873 = vmatprep.subr.mxu0 0.0
        %1874 = vmatpush1.msra.mxu0 0.0
        %1875 = vmatprep.subr.mxu0 0.0
        %1876 = vmatpush1.msra.mxu0 0.0
        %1877 = vmatprep.subr.mxu0 0.0
        %1878 = vmatpush1.msra.mxu0 0.0
        %1879 = vmatprep.subr.mxu0 0.0
        %1880 = vmatpush1.msra.mxu0 0.0
        %1881 = vmatprep.subr.mxu0 0.0
        %1882 = vmatpush1.msra.mxu0 %v1835
        %1883 = vmatprep.subr.mxu0 0.0
        %1884 = vmatpush1.msra.mxu0 %v1834
        %1885 = vmatprep.subr.mxu0 0.0
        %1886 = vmatpush1.msra.mxu0 %v1833
        %1887 = vmatprep.subr.mxu0 0.0
        %1888 = vmatpush1.msra.mxu0 %v1832
        %1889 = vmatprep.subr.mxu0 0.0
        %1890 = vmatpush2.msra.mxu0 0.0
        %1891 = vmatprep.subr.mxu0 0.0
        %1892 = vmatpush2.msra.mxu0 0.0
        %1893 = vmatprep.subr.mxu0 0.0
        %1894 = vmatpush2.msra.mxu0 0.0
        %1895 = vmatprep.subr.mxu0 0.0
        %1896 = vmatpush2.msra.mxu0 0.0
        %1897 = vmatprep.subr.mxu0 0.0
        %1898 = vmatpush2.msra.mxu0 0.0
        %1899 = vmatprep.subr.mxu0 0.0
        %1900 = vmatpush2.msra.mxu0 0.0
        %1901 = vmatprep.subr.mxu0 0.0
        %1902 = vmatpush2.msra.mxu0 0.0
        %1903 = vmatprep.subr.mxu0 0.0
        %1904 = vmatpush2.msra.mxu0 0.0
        %1905 = vmatprep.subr.mxu0 0.0
        %1906 = vmatpush2.msra.mxu0 0.0
        %1907 = vmatprep.subr.mxu0 0.0
        %1908 = vmatpush2.msra.mxu0 0.0
        %1909 = vmatprep.subr.mxu0 0.0
        %1910 = vmatpush2.msra.mxu0 0.0
        %1911 = vmatprep.subr.mxu0 0.0
        %1912 = vmatpush2.msra.mxu0 0.0
        %1913 = vmatprep.subr.mxu0 0.0
        %1914 = vmatpush2.msra.mxu0 0.0
        %1915 = vmatprep.subr.mxu0 0.0
        %1916 = vmatpush2.msra.mxu0 0.0
        %1917 = vmatprep.subr.mxu0 0.0
        %1918 = vmatpush2.msra.mxu0 0.0
        %1919 = vmatprep.subr.mxu0 0.0
        %1920 = vmatpush2.msra.mxu0 0.0
        %1921 = vmatprep.mubr.f32.mxu0 0.0
        %1922 = vmatmul.mubr.f32.gmra.mxu0 %v1844
        %v1923 = vpop.f32.mrf.mxu0
        %v1924 = vadd.f32 %v1841, %v1923
        %v1925 = vpop.f32.mrf.mxu0
        %1926 = vmatprep.mubr.f32.mxu0 0.0
        %1927 = vmatmul.mubr.f32.gmra.mxu0 %v1847
        %v1928 = vpop.f32.mrf.mxu0
        %v1929 = vadd.f32 %v1841, %v1928
        %v1930 = vpop.f32.mrf.mxu0
        %1931 = vmatprep.mubr.f32.mxu0 0.0
        %1932 = vmatmul.mubr.f32.gmra.mxu0 %v1849
        %v1933 = vpop.f32.mrf.mxu0
        %v1934 = vadd.f32 %v1841, %v1933
        %v1935 = vpop.f32.mrf.mxu0
        %1936 = vmatprep.mubr.f32.mxu0 0.0
        %1937 = vmatmul.mubr.f32.gmra.mxu0 %v1851
        %v1938 = vpop.f32.mrf.mxu0
        %v1939 = vadd.f32 %v1841, %v1938
        %v1940 = vpop.f32.mrf.mxu0
        %1941 = vmatprep.mubr.f32.mxu0 0.0
        %1942 = vmatmul.mubr.f32.gmra.mxu0 %v1853
        %v1943 = vpop.f32.mrf.mxu0
        %v1944 = vadd.f32 %v1841, %v1943
        %v1945 = vpop.f32.mrf.mxu0
        %1946 = vmatprep.mubr.f32.mxu0 0.0
        %1947 = vmatmul.mubr.f32.gmra.mxu0 %v1855
        %v1948 = vpop.f32.mrf.mxu0
        %v1949 = vadd.f32 %v1841, %v1948
        %v1950 = vpop.f32.mrf.mxu0
        %1951 = vdwg.mxu0
        %1952 = vst.msk [vmem:[%s560] sm:$0xff] %vm594, %v1924
        %1953 = vst.msk [vmem:[%s560 + $0x8] sm:$0xff] %vm594, %v1929
        %1958 = vrot.lane.b32.xlu0 %v1934, 96
        %v1959 = vpop.permute.xlu0 %1958
        %1960 = vrot.lane.b32.xlu0 %v1939, 96
        %v1961 = vpop.permute.xlu0 %1960
        %1962 = vrot.lane.b32.xlu0 %v1944, 96
        %v1963 = vpop.permute.xlu0 %1962
        %1964 = vrot.lane.b32.xlu0 %v1949, 96
        %v1965 = vpop.permute.xlu0 %1964
        %1970 = vst.msk [vmem:[%s567] sm:$0xff] %vm594, %v1959
        %1971 = vst.msk [vmem:[%s567 + $0x8] sm:$0xff] %vm594, %v1961
        %1972 = vst.msk [vmem:[%s567 + $0x10] sm:$0xff] %vm594, %v1963
        %1973 = vst.msk [vmem:[%s567 + $0x18] sm:$0xff] %vm594, %v1965
        %s1974 = sand.u32 %s288, 1
        %s1975 = scalar_lea.sflag [#allocation4], %s1974
        %s1976 = sand.u32 %s288, 1
        %s1977 = smul.addr %s1976, 16
        %s1978 = scalar_lea.vmem [#allocation16], %s1977
        %s1979 = sand.u32 %s314, 1
        %s1980 = scalar_lea.sflag [#allocation18], %s1979
        %s1981 = sand.u32 %s314, 1
        %s1982 = smul.addr %s1981, 32
        %s1983 = scalar_lea.vmem [#allocation17], %s1982
        // Predicated region
        $region97: #{encoder_forward.1} parent=63 // pred_check
          %p1984 = pneg %p298
        $region98: #{encoder_forward.1} parent=63 // pred_check_branch
          %1986 = sbr.rel (%p1984) target = $region100
        $region99: #{encoder_forward.1} parent=63 // pred_region
          %s1988 = ssub.s32 256, 256
          %1989 = vsyncadd %s1975, %s1988
          %s1990 = smul.addr %s39, 2
          %s1991 = smul.addr %s1990, 128
          %s1992 = scalar_lea.hbm %s11, %s1991
          %s1993 = sshll.u32 %s1978, 4
          %s1994 = int_to_ptr.vmem [resolvable:$true] %s1993
          %1999 = dma.vmem_to_hbm [thread:$0]  %s1994, 256, %s1992, %s1975, 128, 128, 8
        $region100: #{encoder_forward.1} parent=63 // pred_fallthru
          _
        // Predicated region
        $region101: #{encoder_forward.1} parent=63 // pred_check
          %p2000 = pneg %p324
        $region102: #{encoder_forward.1} parent=63 // pred_check_branch
          %2002 = sbr.rel (%p2000) target = $region104
        $region103: #{encoder_forward.1} parent=63 // pred_region
          %s2004 = ssub.s32 512, 512
          %2005 = vsyncadd %s1980, %s2004
          %s2006 = smul.addr %s39, 4
          %s2007 = smul.addr %s2006, 128
          %s2008 = scalar_lea.hbm %s12, %s2007
          %s2009 = sshll.u32 %s1983, 4
          %s2010 = int_to_ptr.vmem [resolvable:$true] %s2009
          %2015 = dma.vmem_to_hbm [thread:$0]  %s2010, 512, %s2008, %s1980, 128, 128, 8
        $region104: #{encoder_forward.1} parent=63 // pred_fallthru
          _
      $region64: #{encoder_forward.1} parent=5 // pred_fallthru
        _
      %p2016 = scmp.le.s32.totalorder 2, %s34
      // Predicated region
      $region105: #{encoder_forward.1} parent=5 // pred_check
        %p2017 = pneg %p2016
      $region106: #{encoder_forward.1} parent=5 // pred_check_branch
        %2019 = sbr.rel (%p2017) target = $region108
      $region107: #{encoder_forward.1} parent=5 // pred_region
        %s2020 = ssub.s32 %s34, 2
        // Predicated region
        $region109: #{encoder_forward.1} parent=107 // pred_check
          %p2021 = pneg %p304
        $region110: #{encoder_forward.1} parent=107 // pred_check_branch
          %2023 = sbr.rel (%p2021) target = $region112
        $region111: #{encoder_forward.1} parent=107 // pred_region
          %s2024 = sand.u32 %s289, 1
          %s2025 = scalar_lea.sflag [#allocation4], %s2024
          %s2026 = sand.u32 %s289, 1
          %s2027 = smul.addr %s2026, 16
          %s2028 = scalar_lea.vmem [#allocation16], %s2027
          %2029 = dma.done %s2025, 256
        $region112: #{encoder_forward.1} parent=107 // pred_fallthru
          _
        // Predicated region
        $region113: #{encoder_forward.1} parent=107 // pred_check
          %p2030 = pneg %p330
        $region114: #{encoder_forward.1} parent=107 // pred_check_branch
          %2032 = sbr.rel (%p2030) target = $region116
        $region115: #{encoder_forward.1} parent=107 // pred_region
          %s2033 = sand.u32 %s315, 1
          %s2034 = scalar_lea.sflag [#allocation18], %s2033
          %s2035 = sand.u32 %s315, 1
          %s2036 = smul.addr %s2035, 32
          %s2037 = scalar_lea.vmem [#allocation17], %s2036
          %2038 = dma.done %s2034, 512
        $region116: #{encoder_forward.1} parent=107 // pred_fallthru
          _
      $region108: #{encoder_forward.1} parent=5 // pred_fallthru
        _
    $region6: #{encoder_forward.1} parent=1 // loop_footer
      %s38 = sadd.s32 1, %s34
    $region7: #{encoder_forward.1} parent=1 // loop_footer_branch
      %33 = sbr.rel target = $region3
    $region8: #{encoder_forward.1} parent=1 // loop_exit
      _
    %2039 = vsyncpa [#allocation3], 1
    %s2040 = scalar_lea.sflag [#allocation3], 1
    %2041 = vsyncpa %s2040, 1
    %2042 = vsyncpa [#allocation6], 1
    %s2043 = scalar_lea.sflag [#allocation6], 1
    %2044 = vsyncpa %s2043, 1
    %2045 = vsyncpa [#allocation9], 1
    %2046 = vsyncpa [#allocation12], 1
    %2047 = vsyncpa [#allocation15], 1
    %2048 = vsyncpa [#allocation4], 1
    %s2049 = scalar_lea.sflag [#allocation4], 1
    %2050 = vsyncpa %s2049, 1
    %2051 = vsyncpa [#allocation18], 1
    %s2052 = scalar_lea.sflag [#allocation18], 1
    %2053 = vsyncpa %s2052, 1

</llo_original>
